<compile_context>
chip_gen: v6e
topology: v6e:2x2x1
jax: 0.10.0
libtpu: 0.0.40
codegen_flags: <defaults>
</compile_context>

<pallas_src>
import math
from functools import partial

import jax
import jax.numpy as jnp
from jax import lax
from jax.experimental import pallas as pl
from jax.experimental.pallas import tpu as pltpu

# Model hyper-parameters (small, consistent with the module).
EMBED = 32
HEADS = 4
HEAD_DIM = EMBED // HEADS
INNER = 64
LN_EPS = 1e-5  # torch.nn.LayerNorm default


# ----------------------------- in-kernel helpers ----------------------------- #
def _layernorm(v, gamma, beta):
    # PyTorch LayerNorm: biased variance over last dim, eps inside sqrt.
    mu = jnp.mean(v, axis=-1, keepdims=True)
    var = jnp.mean((v - mu) ** 2, axis=-1, keepdims=True)
    return (v - mu) * lax.rsqrt(var + LN_EPS) * gamma + beta


def _softmax_last(s):
    m = jnp.max(s, axis=-1, keepdims=True)
    e = jnp.exp(s - m)
    return e / jnp.sum(e, axis=-1, keepdims=True)


# ------------------------------- the kernel --------------------------------- #
def _encoder_layer_kernel(x_ref, wmain_ref, wf2_ref, vec_ref,
                          out_ref, attn_ref, *, batch, seq, embed, heads, inner):
    head_dim = embed // heads
    n = batch * seq

    x = x_ref[...]  # (N, E) f32, N = B*T

    # ---- static slices of the packed weight / vector slabs ----
    w_qkv = wmain_ref[:, 0:3 * embed]                    # (E, 3E)
    w_o = wmain_ref[:, 3 * embed:4 * embed]              # (E, E)
    w_f1 = wmain_ref[:, 4 * embed:4 * embed + inner]     # (E, inner)
    w_f2 = wf2_ref[...]                                  # (inner, E)

    b_qkv = vec_ref[0:1, 0:3 * embed]                    # (1, 3E)
    b_o = vec_ref[1:2, 0:embed]
    b_f1 = vec_ref[2:3, 0:inner]
    b_f2 = vec_ref[3:4, 0:embed]
    g1 = vec_ref[4:5, 0:embed]
    e1 = vec_ref[5:6, 0:embed]
    g2 = vec_ref[6:7, 0:embed]
    e2 = vec_ref[7:8, 0:embed]

    # ---- fused Q/K/V projection: one (N,E) x (E,3E) matmul ----
    qkv = jnp.dot(x, w_qkv, preferred_element_type=jnp.float32) + b_qkv
    q = qkv[:, 0:embed].reshape(batch, seq, embed)
    k = qkv[:, embed:2 * embed].reshape(batch, seq, embed)
    v = qkv[:, 2 * embed:3 * embed].reshape(batch, seq, embed)

    # ---- scaled dot-product attention (dropout p=0 -> identity) ----
    # TODO(synk): mask (scores.masked_fill(mask == 0, -1e9)) not implemented; mask=None path only.
    scale = 1.0 / math.sqrt(head_dim)
    z_heads = []
    for h in range(heads):  # static unroll over heads; batch handled by einsum batch dim
        lo = h * head_dim
        hi = lo + head_dim
        qh = q[:, :, lo:hi]   # (B, T, Dh)
        kh = k[:, :, lo:hi]
        vh = v[:, :, lo:hi]
        s = jnp.einsum('bqd,bkd->bqk', qh, kh,
                       preferred_element_type=jnp.float32) * scale        # (B, T, T)
        p = _softmax_last(s)
        attn_ref[h] = p.astype(attn_ref.dtype)                             # attn laid out (H, B, T, T)
        z_heads.append(jnp.einsum('bqk,bkd->bqd', p, vh,
                                  preferred_element_type=jnp.float32))     # (B, T, Dh)
    z = jnp.concatenate(z_heads, axis=-1).reshape(n, embed)                # (N, E)

    # ---- output projection + residual + norm1 ----
    attn_out = jnp.dot(z, w_o, preferred_element_type=jnp.float32) + b_o
    res1 = attn_out + x
    n1 = _layernorm(res1, g1, e1)

    # ---- position-wise FFN (dropout p=0 -> identity) + residual + norm2 ----
    hmid = jnp.maximum(jnp.dot(n1, w_f1, preferred_element_type=jnp.float32) + b_f1, 0.0)
    ffn = jnp.dot(hmid, w_f2, preferred_element_type=jnp.float32) + b_f2
    out = _layernorm(ffn + n1, g2, e2)

    out_ref[...] = out.astype(out_ref.dtype)


# ------------------------------- host wrapper -------------------------------- #
def encoder_layer_forward(x, params, mask=None):
    """x: (B, T, E) float32. Returns (out (B,T,E), attn (B,H,T,T)) like the torch module."""
    # TODO(synk): mask argument is accepted but only the mask=None forward path is implemented.
    B, T, E = x.shape
    heads = HEADS
    inner = params['w_f1'].shape[1]
    N = B * T

    # Pack 16 weight/bias/LN tensors into 3 slabs (few DMAs, static slices in-kernel).
    w_main = jnp.concatenate(
        [params['w_q'], params['w_k'], params['w_v'], params['w_o'], params['w_f1']],
        axis=1).astype(jnp.float32)                                  # (E, 3E + E + inner)
    w_f2 = params['w_f2'].astype(jnp.float32)                        # (inner, E)

    vw = max(128, 3 * E, inner)
    vecs = jnp.zeros((8, vw), jnp.float32)
    vecs = vecs.at[0, :3 * E].set(
        jnp.concatenate([params['b_q'], params['b_k'], params['b_v']]))
    vecs = vecs.at[1, :E].set(params['b_o'])
    vecs = vecs.at[2, :inner].set(params['b_f1'])
    vecs = vecs.at[3, :E].set(params['b_f2'])
    vecs = vecs.at[4, :E].set(params['g1'])
    vecs = vecs.at[5, :E].set(params['e1'])
    vecs = vecs.at[6, :E].set(params['g2'])
    vecs = vecs.at[7, :E].set(params['e2'])

    x2 = x.reshape(N, E).astype(jnp.float32)   # lane/sublane-dense (B*T, E) slab

    kernel = partial(_encoder_layer_kernel,
                     batch=B, seq=T, embed=E, heads=heads, inner=inner)

    out2, attn_hb = pl.pallas_call(
        kernel,
        out_shape=(jax.ShapeDtypeStruct((N, E), jnp.float32),
                   jax.ShapeDtypeStruct((heads, B, T, T), jnp.float32)),
        grid=(1,),
        in_specs=[pl.BlockSpec((N, E), lambda i: (0, 0)),
                  pl.BlockSpec(w_main.shape, lambda i: (0, 0)),
                  pl.BlockSpec(w_f2.shape, lambda i: (0, 0)),
                  pl.BlockSpec(vecs.shape, lambda i: (0, 0))],
        out_specs=(pl.BlockSpec((N, E), lambda i: (0, 0)),
                   pl.BlockSpec((heads, B, T, T), lambda i: (0, 0, 0, 0))),
        compiler_params=pltpu.CompilerParams(dimension_semantics=("arbitrary",)),
    )(x2, w_main, w_f2, vecs)

    out = out2.reshape(B, T, E)
    attn = jnp.transpose(attn_hb, (1, 0, 2, 3))   # (B, H, T, T), matching torch
    return out, attn


# ------------------------------ parameter init -------------------------------- #
def _linear_params(key, fan_in, fan_out):
    # torch.nn.Linear default init; weight stored pre-transposed as (in, out).
    kw, kb = jax.random.split(key)
    bound = 1.0 / math.sqrt(fan_in)
    w = jax.random.uniform(kw, (fan_in, fan_out), jnp.float32, -bound, bound)
    b = jax.random.uniform(kb, (fan_out,), jnp.float32, -bound, bound)
    return w, b


def init_encoder_layer_params(key, embed=EMBED, inner=INNER):
    ks = jax.random.split(key, 6)
    w_q, b_q = _linear_params(ks[0], embed, embed)
    w_k, b_k = _linear_params(ks[1], embed, embed)
    w_v, b_v = _linear_params(ks[2], embed, embed)
    w_o, b_o = _linear_params(ks[3], embed, embed)
    w_f1, b_f1 = _linear_params(ks[4], embed, inner)
    w_f2, b_f2 = _linear_params(ks[5], inner, embed)
    return dict(
        w_q=w_q, b_q=b_q, w_k=w_k, b_k=b_k, w_v=w_v, b_v=b_v, w_o=w_o, b_o=b_o,
        w_f1=w_f1, b_f1=b_f1, w_f2=w_f2, b_f2=b_f2,
        g1=jnp.ones((embed,), jnp.float32), e1=jnp.zeros((embed,), jnp.float32),
        g2=jnp.ones((embed,), jnp.float32), e2=jnp.zeros((embed,), jnp.float32))


# ----------------------------------- main ------------------------------------ #
if __name__ == "__main__":
    key = jax.random.PRNGKey(0)
    kx, kp = jax.random.split(key)

    B, T = 2, 8
    x = jax.random.normal(kx, (B, T, EMBED), jnp.float32)
    params = init_encoder_layer_params(kp)

    out, attn = encoder_layer_forward(x, params)
    jax.block_until_ready((out, attn))

    assert out.shape == (B, T, EMBED) and out.dtype == jnp.float32
    assert attn.shape == (B, HEADS, T, T)
    assert bool(jnp.all(jnp.isfinite(out))) and bool(jnp.all(jnp.isfinite(attn)))
    print("KERNEL_OK")
</pallas_src>

<mosaic_0001>
module attributes {stable_mosaic.version = 11 : i64} {
  func.func @_encoder_layer_kernel(%arg0: i32, %arg1: memref<16x32xf32, #tpu.memory_space<vmem>>, %arg2: memref<32x192xf32, #tpu.memory_space<vmem>>, %arg3: memref<64x32xf32, #tpu.memory_space<vmem>>, %arg4: memref<8x128xf32, #tpu.memory_space<vmem>>, %arg5: memref<16x32xf32, #tpu.memory_space<vmem>>, %arg6: memref<4x2x8x8xf32, #tpu.memory_space<vmem>>) attributes {dimension_semantics = [#tpu.dimension_semantics<arbitrary>], iteration_bounds = array<i64: 1>, scalar_prefetch = 0 : i64, scratch_operands = 0 : i64, tpu.core_type = #tpu.core_type<tc>, window_params = [{pipeline_mode = #tpu.pipeline_mode<synchronous>, transform_indices = @transform_0, window_bounds = array<i64: 16, 32>}, {pipeline_mode = #tpu.pipeline_mode<synchronous>, transform_indices = @transform_1, window_bounds = array<i64: 32, 192>}, {pipeline_mode = #tpu.pipeline_mode<synchronous>, transform_indices = @transform_2, window_bounds = array<i64: 64, 32>}, {pipeline_mode = #tpu.pipeline_mode<synchronous>, transform_indices = @transform_3, window_bounds = array<i64: 8, 128>}, {pipeline_mode = #tpu.pipeline_mode<synchronous>, transform_indices = @transform_4, window_bounds = array<i64: 16, 32>}, {pipeline_mode = #tpu.pipeline_mode<synchronous>, transform_indices = @transform_5, window_bounds = array<i64: 4, 2, 8, 8>}]} {
    %c0 = arith.constant 0 : index
    %c0_0 = arith.constant 0 : index
    %0 = vector.load %arg1[%c0, %c0_0] : memref<16x32xf32, #tpu.memory_space<vmem>>, vector<16x32xf32>
    %c0_1 = arith.constant 0 : index
    %c0_2 = arith.constant 0 : index
    %1 = vector.load %arg2[%c0_1, %c0_2] : memref<32x192xf32, #tpu.memory_space<vmem>>, vector<32x96xf32>
    %c0_3 = arith.constant 0 : index
    %c96 = arith.constant 96 : index
    %2 = vector.load %arg2[%c0_3, %c96] : memref<32x192xf32, #tpu.memory_space<vmem>>, vector<32x32xf32>
    %c0_4 = arith.constant 0 : index
    %c128 = arith.constant 128 : index
    %3 = vector.load %arg2[%c0_4, %c128] : memref<32x192xf32, #tpu.memory_space<vmem>>, vector<32x64xf32>
    %c0_5 = arith.constant 0 : index
    %c0_6 = arith.constant 0 : index
    %4 = vector.load %arg3[%c0_5, %c0_6] : memref<64x32xf32, #tpu.memory_space<vmem>>, vector<64x32xf32>
    %c0_7 = arith.constant 0 : index
    %c0_8 = arith.constant 0 : index
    %5 = vector.load %arg4[%c0_7, %c0_8] : memref<8x128xf32, #tpu.memory_space<vmem>>, vector<1x96xf32>
    %c1 = arith.constant 1 : index
    %c0_9 = arith.constant 0 : index
    %6 = vector.load %arg4[%c1, %c0_9] : memref<8x128xf32, #tpu.memory_space<vmem>>, vector<1x32xf32>
    %c2 = arith.constant 2 : index
    %c0_10 = arith.constant 0 : index
    %7 = vector.load %arg4[%c2, %c0_10] : memref<8x128xf32, #tpu.memory_space<vmem>>, vector<1x64xf32>
    %c3 = arith.constant 3 : index
    %c0_11 = arith.constant 0 : index
    %8 = vector.load %arg4[%c3, %c0_11] : memref<8x128xf32, #tpu.memory_space<vmem>>, vector<1x32xf32>
    %c4 = arith.constant 4 : index
    %c0_12 = arith.constant 0 : index
    %9 = vector.load %arg4[%c4, %c0_12] : memref<8x128xf32, #tpu.memory_space<vmem>>, vector<1x32xf32>
    %c5 = arith.constant 5 : index
    %c0_13 = arith.constant 0 : index
    %10 = vector.load %arg4[%c5, %c0_13] : memref<8x128xf32, #tpu.memory_space<vmem>>, vector<1x32xf32>
    %c6 = arith.constant 6 : index
    %c0_14 = arith.constant 0 : index
    %11 = vector.load %arg4[%c6, %c0_14] : memref<8x128xf32, #tpu.memory_space<vmem>>, vector<1x32xf32>
    %c7 = arith.constant 7 : index
    %c0_15 = arith.constant 0 : index
    %12 = vector.load %arg4[%c7, %c0_15] : memref<8x128xf32, #tpu.memory_space<vmem>>, vector<1x32xf32>
    %cst = arith.constant dense<0.000000e+00> : vector<16x96xf32>
    %13 = tpu.matmul %0, %1, %cst {dimension_numbers = #tpu.dot_dimension_numbers<[1], [0], [0], [1], [0, 0, 1, 1], [], []>} : vector<16x32xf32>, vector<32x96xf32>, vector<16x96xf32> -> vector<16x96xf32>
    %14 = vector.broadcast %5 : vector<1x96xf32> to vector<16x96xf32>
    %15 = arith.addf %13, %14 : vector<16x96xf32>
    %16 = vector.extract_strided_slice %15 {offsets = [0, 0], sizes = [16, 32], strides = [1, 1]} : vector<16x96xf32> to vector<16x32xf32>
    %17 = vector.shape_cast %16 : vector<16x32xf32> to vector<2x8x32xf32>
    %18 = vector.extract_strided_slice %15 {offsets = [0, 32], sizes = [16, 32], strides = [1, 1]} : vector<16x96xf32> to vector<16x32xf32>
    %19 = vector.shape_cast %18 : vector<16x32xf32> to vector<2x8x32xf32>
    %20 = vector.extract_strided_slice %15 {offsets = [0, 64], sizes = [16, 32], strides = [1, 1]} : vector<16x96xf32> to vector<16x32xf32>
    %21 = vector.shape_cast %20 : vector<16x32xf32> to vector<2x8x32xf32>
    %22 = vector.extract_strided_slice %17 {offsets = [0, 0, 0], sizes = [2, 8, 8], strides = [1, 1, 1]} : vector<2x8x32xf32> to vector<2x8x8xf32>
    %23 = vector.extract_strided_slice %19 {offsets = [0, 0, 0], sizes = [2, 8, 8], strides = [1, 1, 1]} : vector<2x8x32xf32> to vector<2x8x8xf32>
    %24 = vector.extract_strided_slice %21 {offsets = [0, 0, 0], sizes = [2, 8, 8], strides = [1, 1, 1]} : vector<2x8x32xf32> to vector<2x8x8xf32>
    "tpu.trace_start"() <{level = 10 : i32, message = "bqd,bkd->bqk"}> : () -> ()
    %cst_16 = arith.constant dense<0.000000e+00> : vector<2x8x8xf32>
    %25 = tpu.matmul %22, %23, %cst_16 {dimension_numbers = #tpu.dot_dimension_numbers<[2], [2], [1], [1], [0, 0, 0, 1, 1, 1], [0], [0]>} : vector<2x8x8xf32>, vector<2x8x8xf32>, vector<2x8x8xf32> -> vector<2x8x8xf32>
    "tpu.trace_stop"() : () -> ()
    %cst_17 = arith.constant 0.353553385 : f32
    %26 = vector.broadcast %cst_17 : f32 to vector<2x8x8xf32>
    %27 = arith.mulf %25, %26 : vector<2x8x8xf32>
    %cst_18 = arith.constant dense<0xFF800000> : vector<2x8xf32>
    %28 = vector.multi_reduction <maximumf>, %27, %cst_18 [2] : vector<2x8x8xf32> to vector<2x8xf32>
    %29 = vector.shape_cast %28 : vector<2x8xf32> to vector<2x8x1xf32>
    %30 = vector.broadcast %29 : vector<2x8x1xf32> to vector<2x8x8xf32>
    %31 = arith.subf %27, %30 : vector<2x8x8xf32>
    %32 = math.exp %31 : vector<2x8x8xf32>
    %cst_19 = arith.constant dense<0.000000e+00> : vector<2x8xf32>
    %33 = vector.multi_reduction <add>, %32, %cst_19 [2] : vector<2x8x8xf32> to vector<2x8xf32>
    %34 = vector.shape_cast %33 : vector<2x8xf32> to vector<2x8x1xf32>
    %35 = vector.broadcast %34 : vector<2x8x1xf32> to vector<2x8x8xf32>
    %36 = arith.divf %32, %35 : vector<2x8x8xf32>
    %c0_20 = arith.constant 0 : index
    %c0_21 = arith.constant 0 : index
    %c0_22 = arith.constant 0 : index
    %c0_23 = arith.constant 0 : index
    %37 = vector.load %arg6[%c0_20, %c0_21, %c0_22, %c0_23] : memref<4x2x8x8xf32, #tpu.memory_space<vmem>>, vector<1x2x8x8xf32>
    %38 = vector.shape_cast %37 : vector<1x2x8x8xf32> to vector<2x8x8xf32>
    %39 = vector.shape_cast %36 : vector<2x8x8xf32> to vector<1x2x8x8xf32>
    tpu.vector_store %arg6[%c0_20, %c0_21, %c0_22, %c0_23], %39 {strides = array<i32>} : memref<4x2x8x8xf32, #tpu.memory_space<vmem>>, vector<1x2x8x8xf32>,
    "tpu.trace_start"() <{level = 10 : i32, message = "bqk,bkd->bqd"}> : () -> ()
    %cst_24 = arith.constant dense<0.000000e+00> : vector<2x8x8xf32>
    %40 = tpu.matmul %36, %24, %cst_24 {dimension_numbers = #tpu.dot_dimension_numbers<[2], [1], [1], [2], [0, 0, 0, 1, 1, 2], [0], [0]>} : vector<2x8x8xf32>, vector<2x8x8xf32>, vector<2x8x8xf32> -> vector<2x8x8xf32>
    "tpu.trace_stop"() : () -> ()
    %41 = vector.extract_strided_slice %17 {offsets = [0, 0, 8], sizes = [2, 8, 8], strides = [1, 1, 1]} : vector<2x8x32xf32> to vector<2x8x8xf32>
    %42 = vector.extract_strided_slice %19 {offsets = [0, 0, 8], sizes = [2, 8, 8], strides = [1, 1, 1]} : vector<2x8x32xf32> to vector<2x8x8xf32>
    %43 = vector.extract_strided_slice %21 {offsets = [0, 0, 8], sizes = [2, 8, 8], strides = [1, 1, 1]} : vector<2x8x32xf32> to vector<2x8x8xf32>
    "tpu.trace_start"() <{level = 10 : i32, message = "bqd,bkd->bqk"}> : () -> ()
    %cst_25 = arith.constant dense<0.000000e+00> : vector<2x8x8xf32>
    %44 = tpu.matmul %41, %42, %cst_25 {dimension_numbers = #tpu.dot_dimension_numbers<[2], [2], [1], [1], [0, 0, 0, 1, 1, 1], [0], [0]>} : vector<2x8x8xf32>, vector<2x8x8xf32>, vector<2x8x8xf32> -> vector<2x8x8xf32>
    "tpu.trace_stop"() : () -> ()
    %cst_26 = arith.constant 0.353553385 : f32
    %45 = vector.broadcast %cst_26 : f32 to vector<2x8x8xf32>
    %46 = arith.mulf %44, %45 : vector<2x8x8xf32>
    %cst_27 = arith.constant dense<0xFF800000> : vector<2x8xf32>
    %47 = vector.multi_reduction <maximumf>, %46, %cst_27 [2] : vector<2x8x8xf32> to vector<2x8xf32>
    %48 = vector.shape_cast %47 : vector<2x8xf32> to vector<2x8x1xf32>
    %49 = vector.broadcast %48 : vector<2x8x1xf32> to vector<2x8x8xf32>
    %50 = arith.subf %46, %49 : vector<2x8x8xf32>
    %51 = math.exp %50 : vector<2x8x8xf32>
    %cst_28 = arith.constant dense<0.000000e+00> : vector<2x8xf32>
    %52 = vector.multi_reduction <add>, %51, %cst_28 [2] : vector<2x8x8xf32> to vector<2x8xf32>
    %53 = vector.shape_cast %52 : vector<2x8xf32> to vector<2x8x1xf32>
    %54 = vector.broadcast %53 : vector<2x8x1xf32> to vector<2x8x8xf32>
    %55 = arith.divf %51, %54 : vector<2x8x8xf32>
    %c1_29 = arith.constant 1 : index
    %c0_30 = arith.constant 0 : index
    %c0_31 = arith.constant 0 : index
    %c0_32 = arith.constant 0 : index
    %56 = vector.load %arg6[%c1_29, %c0_30, %c0_31, %c0_32] : memref<4x2x8x8xf32, #tpu.memory_space<vmem>>, vector<1x2x8x8xf32>
    %57 = vector.shape_cast %56 : vector<1x2x8x8xf32> to vector<2x8x8xf32>
    %58 = vector.shape_cast %55 : vector<2x8x8xf32> to vector<1x2x8x8xf32>
    tpu.vector_store %arg6[%c1_29, %c0_30, %c0_31, %c0_32], %58 {strides = array<i32>} : memref<4x2x8x8xf32, #tpu.memory_space<vmem>>, vector<1x2x8x8xf32>,
    "tpu.trace_start"() <{level = 10 : i32, message = "bqk,bkd->bqd"}> : () -> ()
    %cst_33 = arith.constant dense<0.000000e+00> : vector<2x8x8xf32>
    %59 = tpu.matmul %55, %43, %cst_33 {dimension_numbers = #tpu.dot_dimension_numbers<[2], [1], [1], [2], [0, 0, 0, 1, 1, 2], [0], [0]>} : vector<2x8x8xf32>, vector<2x8x8xf32>, vector<2x8x8xf32> -> vector<2x8x8xf32>
    "tpu.trace_stop"() : () -> ()
    %60 = vector.extract_strided_slice %17 {offsets = [0, 0, 16], sizes = [2, 8, 8], strides = [1, 1, 1]} : vector<2x8x32xf32> to vector<2x8x8xf32>
    %61 = vector.extract_strided_slice %19 {offsets = [0, 0, 16], sizes = [2, 8, 8], strides = [1, 1, 1]} : vector<2x8x32xf32> to vector<2x8x8xf32>
    %62 = vector.extract_strided_slice %21 {offsets = [0, 0, 16], sizes = [2, 8, 8], strides = [1, 1, 1]} : vector<2x8x32xf32> to vector<2x8x8xf32>
    "tpu.trace_start"() <{level = 10 : i32, message = "bqd,bkd->bqk"}> : () -> ()
    %cst_34 = arith.constant dense<0.000000e+00> : vector<2x8x8xf32>
    %63 = tpu.matmul %60, %61, %cst_34 {dimension_numbers = #tpu.dot_dimension_numbers<[2], [2], [1], [1], [0, 0, 0, 1, 1, 1], [0], [0]>} : vector<2x8x8xf32>, vector<2x8x8xf32>, vector<2x8x8xf32> -> vector<2x8x8xf32>
    "tpu.trace_stop"() : () -> ()
    %cst_35 = arith.constant 0.353553385 : f32
    %64 = vector.broadcast %cst_35 : f32 to vector<2x8x8xf32>
    %65 = arith.mulf %63, %64 : vector<2x8x8xf32>
    %cst_36 = arith.constant dense<0xFF800000> : vector<2x8xf32>
    %66 = vector.multi_reduction <maximumf>, %65, %cst_36 [2] : vector<2x8x8xf32> to vector<2x8xf32>
    %67 = vector.shape_cast %66 : vector<2x8xf32> to vector<2x8x1xf32>
    %68 = vector.broadcast %67 : vector<2x8x1xf32> to vector<2x8x8xf32>
    %69 = arith.subf %65, %68 : vector<2x8x8xf32>
    %70 = math.exp %69 : vector<2x8x8xf32>
    %cst_37 = arith.constant dense<0.000000e+00> : vector<2x8xf32>
    %71 = vector.multi_reduction <add>, %70, %cst_37 [2] : vector<2x8x8xf32> to vector<2x8xf32>
    %72 = vector.shape_cast %71 : vector<2x8xf32> to vector<2x8x1xf32>
    %73 = vector.broadcast %72 : vector<2x8x1xf32> to vector<2x8x8xf32>
    %74 = arith.divf %70, %73 : vector<2x8x8xf32>
    %c2_38 = arith.constant 2 : index
    %c0_39 = arith.constant 0 : index
    %c0_40 = arith.constant 0 : index
    %c0_41 = arith.constant 0 : index
    %75 = vector.load %arg6[%c2_38, %c0_39, %c0_40, %c0_41] : memref<4x2x8x8xf32, #tpu.memory_space<vmem>>, vector<1x2x8x8xf32>
    %76 = vector.shape_cast %75 : vector<1x2x8x8xf32> to vector<2x8x8xf32>
    %77 = vector.shape_cast %74 : vector<2x8x8xf32> to vector<1x2x8x8xf32>
    tpu.vector_store %arg6[%c2_38, %c0_39, %c0_40, %c0_41], %77 {strides = array<i32>} : memref<4x2x8x8xf32, #tpu.memory_space<vmem>>, vector<1x2x8x8xf32>,
    "tpu.trace_start"() <{level = 10 : i32, message = "bqk,bkd->bqd"}> : () -> ()
    %cst_42 = arith.constant dense<0.000000e+00> : vector<2x8x8xf32>
    %78 = tpu.matmul %74, %62, %cst_42 {dimension_numbers = #tpu.dot_dimension_numbers<[2], [1], [1], [2], [0, 0, 0, 1, 1, 2], [0], [0]>} : vector<2x8x8xf32>, vector<2x8x8xf32>, vector<2x8x8xf32> -> vector<2x8x8xf32>
    "tpu.trace_stop"() : () -> ()
    %79 = vector.extract_strided_slice %17 {offsets = [0, 0, 24], sizes = [2, 8, 8], strides = [1, 1, 1]} : vector<2x8x32xf32> to vector<2x8x8xf32>
    %80 = vector.extract_strided_slice %19 {offsets = [0, 0, 24], sizes = [2, 8, 8], strides = [1, 1, 1]} : vector<2x8x32xf32> to vector<2x8x8xf32>
    %81 = vector.extract_strided_slice %21 {offsets = [0, 0, 24], sizes = [2, 8, 8], strides = [1, 1, 1]} : vector<2x8x32xf32> to vector<2x8x8xf32>
    "tpu.trace_start"() <{level = 10 : i32, message = "bqd,bkd->bqk"}> : () -> ()
    %cst_43 = arith.constant dense<0.000000e+00> : vector<2x8x8xf32>
    %82 = tpu.matmul %79, %80, %cst_43 {dimension_numbers = #tpu.dot_dimension_numbers<[2], [2], [1], [1], [0, 0, 0, 1, 1, 1], [0], [0]>} : vector<2x8x8xf32>, vector<2x8x8xf32>, vector<2x8x8xf32> -> vector<2x8x8xf32>
    "tpu.trace_stop"() : () -> ()
    %cst_44 = arith.constant 0.353553385 : f32
    %83 = vector.broadcast %cst_44 : f32 to vector<2x8x8xf32>
    %84 = arith.mulf %82, %83 : vector<2x8x8xf32>
    %cst_45 = arith.constant dense<0xFF800000> : vector<2x8xf32>
    %85 = vector.multi_reduction <maximumf>, %84, %cst_45 [2] : vector<2x8x8xf32> to vector<2x8xf32>
    %86 = vector.shape_cast %85 : vector<2x8xf32> to vector<2x8x1xf32>
    %87 = vector.broadcast %86 : vector<2x8x1xf32> to vector<2x8x8xf32>
    %88 = arith.subf %84, %87 : vector<2x8x8xf32>
    %89 = math.exp %88 : vector<2x8x8xf32>
    %cst_46 = arith.constant dense<0.000000e+00> : vector<2x8xf32>
    %90 = vector.multi_reduction <add>, %89, %cst_46 [2] : vector<2x8x8xf32> to vector<2x8xf32>
    %91 = vector.shape_cast %90 : vector<2x8xf32> to vector<2x8x1xf32>
    %92 = vector.broadcast %91 : vector<2x8x1xf32> to vector<2x8x8xf32>
    %93 = arith.divf %89, %92 : vector<2x8x8xf32>
    %c3_47 = arith.constant 3 : index
    %c0_48 = arith.constant 0 : index
    %c0_49 = arith.constant 0 : index
    %c0_50 = arith.constant 0 : index
    %94 = vector.load %arg6[%c3_47, %c0_48, %c0_49, %c0_50] : memref<4x2x8x8xf32, #tpu.memory_space<vmem>>, vector<1x2x8x8xf32>
    %95 = vector.shape_cast %94 : vector<1x2x8x8xf32> to vector<2x8x8xf32>
    %96 = vector.shape_cast %93 : vector<2x8x8xf32> to vector<1x2x8x8xf32>
    tpu.vector_store %arg6[%c3_47, %c0_48, %c0_49, %c0_50], %96 {strides = array<i32>} : memref<4x2x8x8xf32, #tpu.memory_space<vmem>>, vector<1x2x8x8xf32>,
    "tpu.trace_start"() <{level = 10 : i32, message = "bqk,bkd->bqd"}> : () -> ()
    %cst_51 = arith.constant dense<0.000000e+00> : vector<2x8x8xf32>
    %97 = tpu.matmul %93, %81, %cst_51 {dimension_numbers = #tpu.dot_dimension_numbers<[2], [1], [1], [2], [0, 0, 0, 1, 1, 2], [0], [0]>} : vector<2x8x8xf32>, vector<2x8x8xf32>, vector<2x8x8xf32> -> vector<2x8x8xf32>
    "tpu.trace_stop"() : () -> ()
    %98 = tpu.concatenate %40, %59, %78, %97 in 2 : vector<2x8x8xf32>, vector<2x8x8xf32>, vector<2x8x8xf32>, vector<2x8x8xf32> -> vector<2x8x32xf32>
    %99 = vector.shape_cast %98 : vector<2x8x32xf32> to vector<16x32xf32>
    %cst_52 = arith.constant dense<0.000000e+00> : vector<16x32xf32>
    %100 = tpu.matmul %99, %2, %cst_52 {dimension_numbers = #tpu.dot_dimension_numbers<[1], [0], [0], [1], [0, 0, 1, 1], [], []>} : vector<16x32xf32>, vector<32x32xf32>, vector<16x32xf32> -> vector<16x32xf32>
    %101 = vector.broadcast %6 : vector<1x32xf32> to vector<16x32xf32>
    %102 = arith.addf %100, %101 : vector<16x32xf32>
    %103 = arith.addf %102, %0 : vector<16x32xf32>
    %cst_53 = arith.constant dense<0.000000e+00> : vector<16xf32>
    %104 = vector.multi_reduction <add>, %103, %cst_53 [1] : vector<16x32xf32> to vector<16xf32>
    %105 = vector.shape_cast %104 : vector<16xf32> to vector<16x1xf32>
    %cst_54 = arith.constant 3.200000e+01 : f32
    %106 = vector.broadcast %cst_54 : f32 to vector<16x1xf32>
    %107 = arith.divf %105, %106 : vector<16x1xf32>
    %108 = vector.broadcast %107 : vector<16x1xf32> to vector<16x32xf32>
    %109 = arith.subf %103, %108 : vector<16x32xf32>
    %110 = arith.mulf %109, %109 : vector<16x32xf32>
    %cst_55 = arith.constant dense<0.000000e+00> : vector<16xf32>
    %111 = vector.multi_reduction <add>, %110, %cst_55 [1] : vector<16x32xf32> to vector<16xf32>
    %112 = vector.shape_cast %111 : vector<16xf32> to vector<16x1xf32>
    %cst_56 = arith.constant 3.200000e+01 : f32
    %113 = vector.broadcast %cst_56 : f32 to vector<16x1xf32>
    %114 = arith.divf %112, %113 : vector<16x1xf32>
    %115 = vector.broadcast %107 : vector<16x1xf32> to vector<16x32xf32>
    %116 = arith.subf %103, %115 : vector<16x32xf32>
    %cst_57 = arith.constant 9.99999974E-6 : f32
    %117 = vector.broadcast %cst_57 : f32 to vector<16x1xf32>
    %118 = arith.addf %114, %117 : vector<16x1xf32>
    %119 = math.rsqrt %118 : vector<16x1xf32>
    %120 = vector.broadcast %119 : vector<16x1xf32> to vector<16x32xf32>
    %121 = arith.mulf %116, %120 : vector<16x32xf32>
    %122 = vector.broadcast %9 : vector<1x32xf32> to vector<16x32xf32>
    %123 = arith.mulf %121, %122 : vector<16x32xf32>
    %124 = vector.broadcast %10 : vector<1x32xf32> to vector<16x32xf32>
    %125 = arith.addf %123, %124 : vector<16x32xf32>
    %cst_58 = arith.constant dense<0.000000e+00> : vector<16x64xf32>
    %126 = tpu.matmul %125, %3, %cst_58 {dimension_numbers = #tpu.dot_dimension_numbers<[1], [0], [0], [1], [0, 0, 1, 1], [], []>} : vector<16x32xf32>, vector<32x64xf32>, vector<16x64xf32> -> vector<16x64xf32>
    %127 = vector.broadcast %7 : vector<1x64xf32> to vector<16x64xf32>
    %128 = arith.addf %126, %127 : vector<16x64xf32>
    %cst_59 = arith.constant 0.000000e+00 : f32
    %129 = vector.broadcast %cst_59 : f32 to vector<16x64xf32>
    %130 = arith.maximumf %128, %129 : vector<16x64xf32>
    %cst_60 = arith.constant dense<0.000000e+00> : vector<16x32xf32>
    %131 = tpu.matmul %130, %4, %cst_60 {dimension_numbers = #tpu.dot_dimension_numbers<[1], [0], [0], [1], [0, 0, 1, 1], [], []>} : vector<16x64xf32>, vector<64x32xf32>, vector<16x32xf32> -> vector<16x32xf32>
    %132 = vector.broadcast %8 : vector<1x32xf32> to vector<16x32xf32>
    %133 = arith.addf %131, %132 : vector<16x32xf32>
    %134 = arith.addf %133, %125 : vector<16x32xf32>
    %cst_61 = arith.constant dense<0.000000e+00> : vector<16xf32>
    %135 = vector.multi_reduction <add>, %134, %cst_61 [1] : vector<16x32xf32> to vector<16xf32>
    %136 = vector.shape_cast %135 : vector<16xf32> to vector<16x1xf32>
    %cst_62 = arith.constant 3.200000e+01 : f32
    %137 = vector.broadcast %cst_62 : f32 to vector<16x1xf32>
    %138 = arith.divf %136, %137 : vector<16x1xf32>
    %139 = vector.broadcast %138 : vector<16x1xf32> to vector<16x32xf32>
    %140 = arith.subf %134, %139 : vector<16x32xf32>
    %141 = arith.mulf %140, %140 : vector<16x32xf32>
    %cst_63 = arith.constant dense<0.000000e+00> : vector<16xf32>
    %142 = vector.multi_reduction <add>, %141, %cst_63 [1] : vector<16x32xf32> to vector<16xf32>
    %143 = vector.shape_cast %142 : vector<16xf32> to vector<16x1xf32>
    %cst_64 = arith.constant 3.200000e+01 : f32
    %144 = vector.broadcast %cst_64 : f32 to vector<16x1xf32>
    %145 = arith.divf %143, %144 : vector<16x1xf32>
    %146 = vector.broadcast %138 : vector<16x1xf32> to vector<16x32xf32>
    %147 = arith.subf %134, %146 : vector<16x32xf32>
    %cst_65 = arith.constant 9.99999974E-6 : f32
    %148 = vector.broadcast %cst_65 : f32 to vector<16x1xf32>
    %149 = arith.addf %145, %148 : vector<16x1xf32>
    %150 = math.rsqrt %149 : vector<16x1xf32>
    %151 = vector.broadcast %150 : vector<16x1xf32> to vector<16x32xf32>
    %152 = arith.mulf %147, %151 : vector<16x32xf32>
    %153 = vector.broadcast %11 : vector<1x32xf32> to vector<16x32xf32>
    %154 = arith.mulf %152, %153 : vector<16x32xf32>
    %155 = vector.broadcast %12 : vector<1x32xf32> to vector<16x32xf32>
    %156 = arith.addf %154, %155 : vector<16x32xf32>
    %c0_66 = arith.constant 0 : index
    %c0_67 = arith.constant 0 : index
    %157 = vector.load %arg5[%c0_66, %c0_67] : memref<16x32xf32, #tpu.memory_space<vmem>>, vector<16x32xf32>
    tpu.vector_store %arg5[%c0_66, %c0_67], %156 {strides = array<i32>} : memref<16x32xf32, #tpu.memory_space<vmem>>, vector<16x32xf32>,
    return
  }
  func.func @transform_0(%arg0: i32) -> (i32, i32) {
    %c0_i32 = arith.constant 0 : i32
    %c0_i32_0 = arith.constant 0 : i32
    %c0_i32_1 = arith.constant 0 : i32
    return %c0_i32, %c0_i32_0 : i32, i32
  }
  func.func @transform_1(%arg0: i32) -> (i32, i32) {
    %c0_i32 = arith.constant 0 : i32
    %c0_i32_0 = arith.constant 0 : i32
    %c0_i32_1 = arith.constant 0 : i32
    return %c0_i32, %c0_i32_0 : i32, i32
  }
  func.func @transform_2(%arg0: i32) -> (i32, i32) {
    %c0_i32 = arith.constant 0 : i32
    %c0_i32_0 = arith.constant 0 : i32
    %c0_i32_1 = arith.constant 0 : i32
    return %c0_i32, %c0_i32_0 : i32, i32
  }
  func.func @transform_3(%arg0: i32) -> (i32, i32) {
    %c0_i32 = arith.constant 0 : i32
    %c0_i32_0 = arith.constant 0 : i32
    %c0_i32_1 = arith.constant 0 : i32
    return %c0_i32, %c0_i32_0 : i32, i32
  }
  func.func @transform_4(%arg0: i32) -> (i32, i32) {
    %c0_i32 = arith.constant 0 : i32
    %c0_i32_0 = arith.constant 0 : i32
    %c0_i32_1 = arith.constant 0 : i32
    return %c0_i32, %c0_i32_0 : i32, i32
  }
  func.func @transform_5(%arg0: i32) -> (i32, i32, i32, i32) {
    %c0_i32 = arith.constant 0 : i32
    %c0_i32_0 = arith.constant 0 : i32
    %c0_i32_1 = arith.constant 0 : i32
    %c0_i32_2 = arith.constant 0 : i32
    %c0_i32_3 = arith.constant 0 : i32
    return %c0_i32, %c0_i32_0, %c0_i32_1, %c0_i32_2 : i32, i32, i32, i32
  }
}

</mosaic_0001>

<llo_original>
// kernel: tpu_custom_call.1
$region0: #{tpu_custom_call.1}
  #allocation0 [shape = 'u32[]', space=smem, size = 0x4, offset = 0x4, fixed_abs, tag = 'smem constant byte address 0x4 - core index']
  #allocation1 [shape = 'u32[144,128]{1,0:T(1,128)}', space=vmem, size = 0x12000, scoped, tag = 'internal scratch']
  %s0 = inlined_call_operand.vmem [shape: f32[16,32], index: 0, kind: input, shape index: {}]
  %s1 = inlined_call_operand.vmem [shape: f32[32,192], index: 1, kind: input, shape index: {}]
  %s2 = inlined_call_operand.vmem [shape: f32[64,32], index: 2, kind: input, shape index: {}]
  %s3 = inlined_call_operand.vmem [shape: f32[8,128], index: 3, kind: input, shape index: {}]
  %s4 = inlined_call_operand.hbm [shape: f32[16,32], index: 4, kind: output, shape index: {0}]
  %s5 = inlined_call_operand.hbm [shape: f32[4,2,8,8], index: 5, kind: output, shape index: {1}]
  %6 = xla_tuple %s4, %s5
  %s7 = sld [smem:[#allocation0]]
  $region34: #{tpu_custom_call.1} parent=0
    _
  %s9 = ssub.s32 1, %s7
  %s10 = scalar_select 0, %s9, %s7
  $region1: #{tpu_custom_call.1} parent=0
    #allocation2 [shape = 'u8[8192]{0}', space=vmem, size = 0x2000, scoped, tag = 'output window, operand 0, single buffered']
    #allocation3 [shape = 's32[1]{0}', space=sflag, size = 0x4, scoped, tag = 'scoped memory for tpu_custom_call.1']
    #allocation4 [shape = 'u8[32768]{0}', space=vmem, size = 0x8000, scoped, tag = 'output window, operand 1, single buffered']
    #allocation5 [shape = 's32[1]{0}', space=sflag, size = 0x4, scoped, tag = 'scoped memory for tpu_custom_call.1']
    %11 = vsyncpa [#allocation3], 0
    %12 = vsyncpa [#allocation5], 0
    // Predicated region
    $region2: #{tpu_custom_call.1} parent=1 // pred_check
      _
    $region3: #{tpu_custom_call.1} parent=1 // pred_check_branch
      %14 = sbr.rel (0) target = $region5
    $region4: #{tpu_custom_call.1} parent=1 // pred_region
      _
    $region5: #{tpu_custom_call.1} parent=1 // pred_fallthru
      _
    // Predicated region
    $region6: #{tpu_custom_call.1} parent=1 // pred_check
      _
    $region7: #{tpu_custom_call.1} parent=1 // pred_check_branch
      %16 = sbr.rel (0) target = $region9
    $region8: #{tpu_custom_call.1} parent=1 // pred_region
      _
    $region9: #{tpu_custom_call.1} parent=1 // pred_fallthru
      _
    // Predicated region
    $region10: #{tpu_custom_call.1} parent=1 // pred_check
      _
    $region11: #{tpu_custom_call.1} parent=1 // pred_check_branch
      %18 = sbr.rel (0) target = $region13
    $region12: #{tpu_custom_call.1} parent=1 // pred_region
      _
    $region13: #{tpu_custom_call.1} parent=1 // pred_fallthru
      _
    // Predicated region
    $region14: #{tpu_custom_call.1} parent=1 // pred_check
      _
    $region15: #{tpu_custom_call.1} parent=1 // pred_check_branch
      %20 = sbr.rel (0) target = $region17
    $region16: #{tpu_custom_call.1} parent=1 // pred_region
      _
    $region17: #{tpu_custom_call.1} parent=1 // pred_fallthru
      _
    %v21 = vld [vmem:[%s0] sm:$0xff]
    %v22 = vld [vmem:[%s0 + $0x8] sm:$0xff]
    %v23 = vld [vmem:[%s1] sm:$0xff]
    %v24 = vld [vmem:[%s1 + $0x10] sm:$0xff]
    %v25 = vld [vmem:[%s1 + $0x20] sm:$0xff]
    %v26 = vld [vmem:[%s1 + $0x30] sm:$0xff]
    %v27 = vld [vmem:[%s1 + $0x8] sm:$0xff]
    %v28 = vld [vmem:[%s1 + $0x18] sm:$0xff]
    %v29 = vld [vmem:[%s1 + $0x28] sm:$0xff]
    %v30 = vld [vmem:[%s1 + $0x38] sm:$0xff]
    %v31 = vld [vmem:[%s2] sm:$0xff]
    %v32 = vld [vmem:[%s2 + $0x8] sm:$0xff]
    %v33 = vld [vmem:[%s2 + $0x10] sm:$0xff]
    %v34 = vld [vmem:[%s2 + $0x18] sm:$0xff]
    %v35 = vld [vmem:[%s2 + $0x20] sm:$0xff]
    %v36 = vld [vmem:[%s2 + $0x28] sm:$0xff]
    %v37 = vld [vmem:[%s2 + $0x30] sm:$0xff]
    %v38 = vld [vmem:[%s2 + $0x38] sm:$0xff]
    %v39 = vld [vmem:[%s3] sm:$0x1]
    %v40 = vld [vmem:[%s3 + $0x1] sm:$0x1]
    %v41 = vld [vmem:[%s3 + $0x2] sm:$0x1]
    %v42 = vld [vmem:[%s3 + $0x3] sm:$0x1]
    %v43 = vld [vmem:[%s3 + $0x4] sm:$0x1]
    %v44 = vld [vmem:[%s3 + $0x5] sm:$0x1]
    %v45 = vld [vmem:[%s3 + $0x6] sm:$0x1]
    %v46 = vld [vmem:[%s3 + $0x7] sm:$0x1]
    %v47 = vlaneseq
    %v48 = vshrl.u32 %v47, 7
    %v49 = vsub.s32 0, %v48
    %v50 = vrot.slane %v39, %v49
    %vm51 = vcmask 261120
    %v53 = vsel %vm51, %v21, 0
    %v56 = vsel %vm51, %v22, 0
    %58 = vmatprep.subr.mxu0 0.0
    %59 = vmatpush1.msra.mxu0 0.0
    %60 = vmatprep.subr.mxu0 0.0
    %61 = vmatpush1.msra.mxu0 0.0
    %62 = vmatprep.subr.mxu0 0.0
    %63 = vmatpush1.msra.mxu0 0.0
    %64 = vmatprep.subr.mxu0 0.0
    %65 = vmatpush1.msra.mxu0 0.0
    %66 = vmatprep.subr.mxu0 0.0
    %67 = vmatpush1.msra.mxu0 0.0
    %68 = vmatprep.subr.mxu0 0.0
    %69 = vmatpush1.msra.mxu0 0.0
    %70 = vmatprep.subr.mxu0 0.0
    %71 = vmatpush1.msra.mxu0 0.0
    %72 = vmatprep.subr.mxu0 0.0
    %73 = vmatpush1.msra.mxu0 0.0
    %74 = vmatprep.subr.mxu0 0.0
    %75 = vmatpush1.msra.mxu0 0.0
    %76 = vmatprep.subr.mxu0 0.0
    %77 = vmatpush1.msra.mxu0 0.0
    %78 = vmatprep.subr.mxu0 0.0
    %79 = vmatpush1.msra.mxu0 0.0
    %80 = vmatprep.subr.mxu0 0.0
    %81 = vmatpush1.msra.mxu0 0.0
    %82 = vmatprep.subr.mxu0 0.0
    %83 = vmatpush1.msra.mxu0 %v26
    %84 = vmatprep.subr.mxu0 0.0
    %85 = vmatpush1.msra.mxu0 %v25
    %86 = vmatprep.subr.mxu0 0.0
    %87 = vmatpush1.msra.mxu0 %v24
    %88 = vmatprep.subr.mxu0 0.0
    %89 = vmatpush1.msra.mxu0 %v23
    %90 = vmatprep.subr.mxu0 0.0
    %91 = vmatpush2.msra.mxu0 0.0
    %92 = vmatprep.subr.mxu0 0.0
    %93 = vmatpush2.msra.mxu0 0.0
    %94 = vmatprep.subr.mxu0 0.0
    %95 = vmatpush2.msra.mxu0 0.0
    %96 = vmatprep.subr.mxu0 0.0
    %97 = vmatpush2.msra.mxu0 0.0
    %98 = vmatprep.subr.mxu0 0.0
    %99 = vmatpush2.msra.mxu0 0.0
    %100 = vmatprep.subr.mxu0 0.0
    %101 = vmatpush2.msra.mxu0 0.0
    %102 = vmatprep.subr.mxu0 0.0
    %103 = vmatpush2.msra.mxu0 0.0
    %104 = vmatprep.subr.mxu0 0.0
    %105 = vmatpush2.msra.mxu0 0.0
    %106 = vmatprep.subr.mxu0 0.0
    %107 = vmatpush2.msra.mxu0 0.0
    %108 = vmatprep.subr.mxu0 0.0
    %109 = vmatpush2.msra.mxu0 0.0
    %110 = vmatprep.subr.mxu0 0.0
    %111 = vmatpush2.msra.mxu0 0.0
    %112 = vmatprep.subr.mxu0 0.0
    %113 = vmatpush2.msra.mxu0 0.0
    %114 = vmatprep.subr.mxu0 0.0
    %115 = vmatpush2.msra.mxu0 0.0
    %116 = vmatprep.subr.mxu0 0.0
    %117 = vmatpush2.msra.mxu0 0.0
    %118 = vmatprep.subr.mxu0 0.0
    %119 = vmatpush2.msra.mxu0 0.0
    %120 = vmatprep.subr.mxu0 0.0
    %121 = vmatpush2.msra.mxu0 0.0
    %122 = vmatprep.mubr.f32.mxu0 0.0
    %123 = vmatmul.mubr.f32.gmra.mxu0 %v53
    %v124 = vpop.f32.mrf.mxu0
    %v125 = vadd.f32 %v50, %v124
    %v126 = vpop.f32.mrf.mxu0
    %127 = vmatprep.mubr.f32.mxu0 0.0
    %128 = vmatmul.mubr.f32.gmra.mxu0 %v56
    %v129 = vpop.f32.mrf.mxu0
    %v130 = vadd.f32 %v50, %v129
    %v131 = vpop.f32.mrf.mxu0
    %132 = vdwg.mxu0
    %134 = vrot.lane.b32.xlu0 %v125, 96
    %v135 = vpop.permute.xlu0 %134
    %vm136 = vcmask 64512
    %v137 = vsel %vm136, %v125, 0
    %v139 = vsel %vm136, %v135, 0
    %141 = vmatprep.subr.mxu0 0.0
    %142 = vmatpush1.xpose.msra.mxu0 0.0
    %143 = vmatprep.subr.mxu0 0.0
    %144 = vmatpush1.xpose.msra.mxu0 0.0
    %145 = vmatprep.subr.mxu0 0.0
    %146 = vmatpush1.xpose.msra.mxu0 0.0
    %147 = vmatprep.subr.mxu0 0.0
    %148 = vmatpush1.xpose.msra.mxu0 0.0
    %149 = vmatprep.subr.mxu0 0.0
    %150 = vmatpush1.xpose.msra.mxu0 0.0
    %151 = vmatprep.subr.mxu0 0.0
    %152 = vmatpush1.xpose.msra.mxu0 0.0
    %153 = vmatprep.subr.mxu0 0.0
    %154 = vmatpush1.xpose.msra.mxu0 0.0
    %155 = vmatprep.subr.mxu0 0.0
    %156 = vmatpush1.xpose.msra.mxu0 0.0
    %157 = vmatprep.subr.mxu0 0.0
    %158 = vmatpush1.xpose.msra.mxu0 0.0
    %159 = vmatprep.subr.mxu0 0.0
    %160 = vmatpush1.xpose.msra.mxu0 0.0
    %161 = vmatprep.subr.mxu0 0.0
    %162 = vmatpush1.xpose.msra.mxu0 0.0
    %163 = vmatprep.subr.mxu0 0.0
    %164 = vmatpush1.xpose.msra.mxu0 0.0
    %165 = vmatprep.subr.mxu0 0.0
    %166 = vmatpush1.xpose.msra.mxu0 0.0
    %167 = vmatprep.subr.mxu0 0.0
    %168 = vmatpush1.xpose.msra.mxu0 0.0
    %169 = vmatprep.subr.mxu0 0.0
    %170 = vmatpush1.xpose.msra.mxu0 0.0
    %171 = vmatprep.subr.mxu0 0.0
    %172 = vmatpush1.xpose.msra.mxu0 %v139
    %173 = vmatprep.subr.mxu0 0.0
    %174 = vmatpush2.xpose.msra.mxu0 0.0
    %175 = vmatprep.subr.mxu0 0.0
    %176 = vmatpush2.xpose.msra.mxu0 0.0
    %177 = vmatprep.subr.mxu0 0.0
    %178 = vmatpush2.xpose.msra.mxu0 0.0
    %179 = vmatprep.subr.mxu0 0.0
    %180 = vmatpush2.xpose.msra.mxu0 0.0
    %181 = vmatprep.subr.mxu0 0.0
    %182 = vmatpush2.xpose.msra.mxu0 0.0
    %183 = vmatprep.subr.mxu0 0.0
    %184 = vmatpush2.xpose.msra.mxu0 0.0
    %185 = vmatprep.subr.mxu0 0.0
    %186 = vmatpush2.xpose.msra.mxu0 0.0
    %187 = vmatprep.subr.mxu0 0.0
    %188 = vmatpush2.xpose.msra.mxu0 0.0
    %189 = vmatprep.subr.mxu0 0.0
    %190 = vmatpush2.xpose.msra.mxu0 0.0
    %191 = vmatprep.subr.mxu0 0.0
    %192 = vmatpush2.xpose.msra.mxu0 0.0
    %193 = vmatprep.subr.mxu0 0.0
    %194 = vmatpush2.xpose.msra.mxu0 0.0
    %195 = vmatprep.subr.mxu0 0.0
    %196 = vmatpush2.xpose.msra.mxu0 0.0
    %197 = vmatprep.subr.mxu0 0.0
    %198 = vmatpush2.xpose.msra.mxu0 0.0
    %199 = vmatprep.subr.mxu0 0.0
    %200 = vmatpush2.xpose.msra.mxu0 0.0
    %201 = vmatprep.subr.mxu0 0.0
    %202 = vmatpush2.xpose.msra.mxu0 0.0
    %203 = vmatprep.subr.mxu0 0.0
    %204 = vmatpush2.xpose.msra.mxu0 0.0
    %205 = vmatprep.mubr.f32.mxu0 0.0
    %206 = vmatmul.mubr.f32.gmra.mxu0 %v137
    %v207 = vpop.f32.mrf.mxu0
    %v208 = vadd.f32 0.0, %v207
    %v209 = vpop.f32.mrf.mxu0
    %210 = vdwg.mxu0
    %212 = vrot.lane.b32.xlu0 %v130, 96
    %v213 = vpop.permute.xlu0 %212
    %v214 = vsel %vm136, %v130, 0
    %v216 = vsel %vm136, %v213, 0
    %218 = vmatprep.subr.mxu0 0.0
    %219 = vmatpush1.xpose.msra.mxu0 0.0
    %220 = vmatprep.subr.mxu0 0.0
    %221 = vmatpush1.xpose.msra.mxu0 0.0
    %222 = vmatprep.subr.mxu0 0.0
    %223 = vmatpush1.xpose.msra.mxu0 0.0
    %224 = vmatprep.subr.mxu0 0.0
    %225 = vmatpush1.xpose.msra.mxu0 0.0
    %226 = vmatprep.subr.mxu0 0.0
    %227 = vmatpush1.xpose.msra.mxu0 0.0
    %228 = vmatprep.subr.mxu0 0.0
    %229 = vmatpush1.xpose.msra.mxu0 0.0
    %230 = vmatprep.subr.mxu0 0.0
    %231 = vmatpush1.xpose.msra.mxu0 0.0
    %232 = vmatprep.subr.mxu0 0.0
    %233 = vmatpush1.xpose.msra.mxu0 0.0
    %234 = vmatprep.subr.mxu0 0.0
    %235 = vmatpush1.xpose.msra.mxu0 0.0
    %236 = vmatprep.subr.mxu0 0.0
    %237 = vmatpush1.xpose.msra.mxu0 0.0
    %238 = vmatprep.subr.mxu0 0.0
    %239 = vmatpush1.xpose.msra.mxu0 0.0
    %240 = vmatprep.subr.mxu0 0.0
    %241 = vmatpush1.xpose.msra.mxu0 0.0
    %242 = vmatprep.subr.mxu0 0.0
    %243 = vmatpush1.xpose.msra.mxu0 0.0
    %244 = vmatprep.subr.mxu0 0.0
    %245 = vmatpush1.xpose.msra.mxu0 0.0
    %246 = vmatprep.subr.mxu0 0.0
    %247 = vmatpush1.xpose.msra.mxu0 0.0
    %248 = vmatprep.subr.mxu0 0.0
    %249 = vmatpush1.xpose.msra.mxu0 %v216
    %250 = vmatprep.subr.mxu0 0.0
    %251 = vmatpush2.xpose.msra.mxu0 0.0
    %252 = vmatprep.subr.mxu0 0.0
    %253 = vmatpush2.xpose.msra.mxu0 0.0
    %254 = vmatprep.subr.mxu0 0.0
    %255 = vmatpush2.xpose.msra.mxu0 0.0
    %256 = vmatprep.subr.mxu0 0.0
    %257 = vmatpush2.xpose.msra.mxu0 0.0
    %258 = vmatprep.subr.mxu0 0.0
    %259 = vmatpush2.xpose.msra.mxu0 0.0
    %260 = vmatprep.subr.mxu0 0.0
    %261 = vmatpush2.xpose.msra.mxu0 0.0
    %262 = vmatprep.subr.mxu0 0.0
    %263 = vmatpush2.xpose.msra.mxu0 0.0
    %264 = vmatprep.subr.mxu0 0.0
    %265 = vmatpush2.xpose.msra.mxu0 0.0
    %266 = vmatprep.subr.mxu0 0.0
    %267 = vmatpush2.xpose.msra.mxu0 0.0
    %268 = vmatprep.subr.mxu0 0.0
    %269 = vmatpush2.xpose.msra.mxu0 0.0
    %270 = vmatprep.subr.mxu0 0.0
    %271 = vmatpush2.xpose.msra.mxu0 0.0
    %272 = vmatprep.subr.mxu0 0.0
    %273 = vmatpush2.xpose.msra.mxu0 0.0
    %274 = vmatprep.subr.mxu0 0.0
    %275 = vmatpush2.xpose.msra.mxu0 0.0
    %276 = vmatprep.subr.mxu0 0.0
    %277 = vmatpush2.xpose.msra.mxu0 0.0
    %278 = vmatprep.subr.mxu0 0.0
    %279 = vmatpush2.xpose.msra.mxu0 0.0
    %280 = vmatprep.subr.mxu0 0.0
    %281 = vmatpush2.xpose.msra.mxu0 0.0
    %282 = vmatprep.mubr.f32.mxu0 0.0
    %283 = vmatmul.mubr.f32.gmra.mxu0 %v214
    %v284 = vpop.f32.mrf.mxu0
    %v285 = vadd.f32 0.0, %v284
    %v286 = vpop.f32.mrf.mxu0
    %287 = vdwg.mxu0
    %v288 = vmul.f32 %v208, 0.35355338
    %v289 = vmul.f32 %v285, 0.35355338
    %v290 = vsel %vm136, %v288, -inf
    %291 = vmax.xlane.f32.xlu0 %v290
    %v292 = vpop.xlane.xlu0 %291
    %v293 = vsel %vm136, %v289, -inf
    %294 = vmax.xlane.f32.xlu0 %v293
    %v295 = vpop.xlane.xlu0 %294
    %v296 = vsub.f32 %v288, %v292
    %v297 = vsub.f32 %v289, %v295
    %v298 = vmul.f32 %v296, 1.442695
    %v299 = vpow.pop %v298
    %v300 = vmul.f32 %v297, 1.442695
    %v301 = vpow.pop %v300
    %v302 = vsel %vm136, %v299, 0.0
    %303 = vadd.xlane.f32.xlu0 %v302
    %v304 = vpop.xlane.xlu0 %303
    %v305 = vsel %vm136, %v301, 0.0
    %306 = vadd.xlane.f32.xlu0 %v305
    %v307 = vpop.xlane.xlu0 %306
    %v308 = vrcp.pop %v304
    %v309 = vmul.f32 %v299, %v308
    %v310 = vrcp.pop %v307
    %v311 = vmul.f32 %v301, %v310
    %312 = vst.msk [vmem:[#allocation4] sm:$0xff] %vm136, %v309
    %313 = vst.msk [vmem:[#allocation4 + $0x8] sm:$0xff] %vm136, %v311
    %314 = vrot.lane.b32.xlu0 %v125, 64
    %v315 = vpop.permute.xlu0 %314
    %v318 = vsel %vm136, %v309, 0
    %320 = vmatprep.subr.mxu0 0.0
    %321 = vmatpush1.msra.mxu0 0.0
    %322 = vmatprep.subr.mxu0 0.0
    %323 = vmatpush1.msra.mxu0 0.0
    %324 = vmatprep.subr.mxu0 0.0
    %325 = vmatpush1.msra.mxu0 0.0
    %326 = vmatprep.subr.mxu0 0.0
    %327 = vmatpush1.msra.mxu0 0.0
    %328 = vmatprep.subr.mxu0 0.0
    %329 = vmatpush1.msra.mxu0 0.0
    %330 = vmatprep.subr.mxu0 0.0
    %331 = vmatpush1.msra.mxu0 0.0
    %332 = vmatprep.subr.mxu0 0.0
    %333 = vmatpush1.msra.mxu0 0.0
    %334 = vmatprep.subr.mxu0 0.0
    %335 = vmatpush1.msra.mxu0 0.0
    %336 = vmatprep.subr.mxu0 0.0
    %337 = vmatpush1.msra.mxu0 0.0
    %338 = vmatprep.subr.mxu0 0.0
    %339 = vmatpush1.msra.mxu0 0.0
    %340 = vmatprep.subr.mxu0 0.0
    %341 = vmatpush1.msra.mxu0 0.0
    %342 = vmatprep.subr.mxu0 0.0
    %343 = vmatpush1.msra.mxu0 0.0
    %344 = vmatprep.subr.mxu0 0.0
    %345 = vmatpush1.msra.mxu0 0.0
    %346 = vmatprep.subr.mxu0 0.0
    %347 = vmatpush1.msra.mxu0 0.0
    %348 = vmatprep.subr.mxu0 0.0
    %349 = vmatpush1.msra.mxu0 0.0
    %350 = vmatprep.subr.mxu0 0.0
    %351 = vmatpush1.msra.mxu0 %v315
    %352 = vmatprep.subr.mxu0 0.0
    %353 = vmatpush2.msra.mxu0 0.0
    %354 = vmatprep.subr.mxu0 0.0
    %355 = vmatpush2.msra.mxu0 0.0
    %356 = vmatprep.subr.mxu0 0.0
    %357 = vmatpush2.msra.mxu0 0.0
    %358 = vmatprep.subr.mxu0 0.0
    %359 = vmatpush2.msra.mxu0 0.0
    %360 = vmatprep.subr.mxu0 0.0
    %361 = vmatpush2.msra.mxu0 0.0
    %362 = vmatprep.subr.mxu0 0.0
    %363 = vmatpush2.msra.mxu0 0.0
    %364 = vmatprep.subr.mxu0 0.0
    %365 = vmatpush2.msra.mxu0 0.0
    %366 = vmatprep.subr.mxu0 0.0
    %367 = vmatpush2.msra.mxu0 0.0
    %368 = vmatprep.subr.mxu0 0.0
    %369 = vmatpush2.msra.mxu0 0.0
    %370 = vmatprep.subr.mxu0 0.0
    %371 = vmatpush2.msra.mxu0 0.0
    %372 = vmatprep.subr.mxu0 0.0
    %373 = vmatpush2.msra.mxu0 0.0
    %374 = vmatprep.subr.mxu0 0.0
    %375 = vmatpush2.msra.mxu0 0.0
    %376 = vmatprep.subr.mxu0 0.0
    %377 = vmatpush2.msra.mxu0 0.0
    %378 = vmatprep.subr.mxu0 0.0
    %379 = vmatpush2.msra.mxu0 0.0
    %380 = vmatprep.subr.mxu0 0.0
    %381 = vmatpush2.msra.mxu0 0.0
    %382 = vmatprep.subr.mxu0 0.0
    %383 = vmatpush2.msra.mxu0 0.0
    %384 = vmatprep.mubr.f32.mxu0 0.0
    %385 = vmatmul.mubr.f32.gmra.mxu0 %v318
    %v386 = vpop.f32.mrf.mxu0
    %v387 = vadd.f32 0.0, %v386
    %v388 = vpop.f32.mrf.mxu0
    %389 = vdwg.mxu0
    %390 = vrot.lane.b32.xlu0 %v130, 64
    %v391 = vpop.permute.xlu0 %390
    %v394 = vsel %vm136, %v311, 0
    %396 = vmatprep.subr.mxu0 0.0
    %397 = vmatpush1.msra.mxu0 0.0
    %398 = vmatprep.subr.mxu0 0.0
    %399 = vmatpush1.msra.mxu0 0.0
    %400 = vmatprep.subr.mxu0 0.0
    %401 = vmatpush1.msra.mxu0 0.0
    %402 = vmatprep.subr.mxu0 0.0
    %403 = vmatpush1.msra.mxu0 0.0
    %404 = vmatprep.subr.mxu0 0.0
    %405 = vmatpush1.msra.mxu0 0.0
    %406 = vmatprep.subr.mxu0 0.0
    %407 = vmatpush1.msra.mxu0 0.0
    %408 = vmatprep.subr.mxu0 0.0
    %409 = vmatpush1.msra.mxu0 0.0
    %410 = vmatprep.subr.mxu0 0.0
    %411 = vmatpush1.msra.mxu0 0.0
    %412 = vmatprep.subr.mxu0 0.0
    %413 = vmatpush1.msra.mxu0 0.0
    %414 = vmatprep.subr.mxu0 0.0
    %415 = vmatpush1.msra.mxu0 0.0
    %416 = vmatprep.subr.mxu0 0.0
    %417 = vmatpush1.msra.mxu0 0.0
    %418 = vmatprep.subr.mxu0 0.0
    %419 = vmatpush1.msra.mxu0 0.0
    %420 = vmatprep.subr.mxu0 0.0
    %421 = vmatpush1.msra.mxu0 0.0
    %422 = vmatprep.subr.mxu0 0.0
    %423 = vmatpush1.msra.mxu0 0.0
    %424 = vmatprep.subr.mxu0 0.0
    %425 = vmatpush1.msra.mxu0 0.0
    %426 = vmatprep.subr.mxu0 0.0
    %427 = vmatpush1.msra.mxu0 %v391
    %428 = vmatprep.subr.mxu0 0.0
    %429 = vmatpush2.msra.mxu0 0.0
    %430 = vmatprep.subr.mxu0 0.0
    %431 = vmatpush2.msra.mxu0 0.0
    %432 = vmatprep.subr.mxu0 0.0
    %433 = vmatpush2.msra.mxu0 0.0
    %434 = vmatprep.subr.mxu0 0.0
    %435 = vmatpush2.msra.mxu0 0.0
    %436 = vmatprep.subr.mxu0 0.0
    %437 = vmatpush2.msra.mxu0 0.0
    %438 = vmatprep.subr.mxu0 0.0
    %439 = vmatpush2.msra.mxu0 0.0
    %440 = vmatprep.subr.mxu0 0.0
    %441 = vmatpush2.msra.mxu0 0.0
    %442 = vmatprep.subr.mxu0 0.0
    %443 = vmatpush2.msra.mxu0 0.0
    %444 = vmatprep.subr.mxu0 0.0
    %445 = vmatpush2.msra.mxu0 0.0
    %446 = vmatprep.subr.mxu0 0.0
    %447 = vmatpush2.msra.mxu0 0.0
    %448 = vmatprep.subr.mxu0 0.0
    %449 = vmatpush2.msra.mxu0 0.0
    %450 = vmatprep.subr.mxu0 0.0
    %451 = vmatpush2.msra.mxu0 0.0
    %452 = vmatprep.subr.mxu0 0.0
    %453 = vmatpush2.msra.mxu0 0.0
    %454 = vmatprep.subr.mxu0 0.0
    %455 = vmatpush2.msra.mxu0 0.0
    %456 = vmatprep.subr.mxu0 0.0
    %457 = vmatpush2.msra.mxu0 0.0
    %458 = vmatprep.subr.mxu0 0.0
    %459 = vmatpush2.msra.mxu0 0.0
    %460 = vmatprep.mubr.f32.mxu0 0.0
    %461 = vmatmul.mubr.f32.gmra.mxu0 %v394
    %v462 = vpop.f32.mrf.mxu0
    %v463 = vadd.f32 0.0, %v462
    %v464 = vpop.f32.mrf.mxu0
    %465 = vdwg.mxu0
    %466 = vrot.lane.b32.xlu0 %v125, 120
    %v467 = vpop.permute.xlu0 %466
    %468 = vrot.lane.b32.xlu0 %v125, 88
    %v469 = vpop.permute.xlu0 %468
    %v470 = vsel %vm136, %v467, 0
    %v472 = vsel %vm136, %v469, 0
    %474 = vmatprep.subr.mxu0 0.0
    %475 = vmatpush1.xpose.msra.mxu0 0.0
    %476 = vmatprep.subr.mxu0 0.0
    %477 = vmatpush1.xpose.msra.mxu0 0.0
    %478 = vmatprep.subr.mxu0 0.0
    %479 = vmatpush1.xpose.msra.mxu0 0.0
    %480 = vmatprep.subr.mxu0 0.0
    %481 = vmatpush1.xpose.msra.mxu0 0.0
    %482 = vmatprep.subr.mxu0 0.0
    %483 = vmatpush1.xpose.msra.mxu0 0.0
    %484 = vmatprep.subr.mxu0 0.0
    %485 = vmatpush1.xpose.msra.mxu0 0.0
    %486 = vmatprep.subr.mxu0 0.0
    %487 = vmatpush1.xpose.msra.mxu0 0.0
    %488 = vmatprep.subr.mxu0 0.0
    %489 = vmatpush1.xpose.msra.mxu0 0.0
    %490 = vmatprep.subr.mxu0 0.0
    %491 = vmatpush1.xpose.msra.mxu0 0.0
    %492 = vmatprep.subr.mxu0 0.0
    %493 = vmatpush1.xpose.msra.mxu0 0.0
    %494 = vmatprep.subr.mxu0 0.0
    %495 = vmatpush1.xpose.msra.mxu0 0.0
    %496 = vmatprep.subr.mxu0 0.0
    %497 = vmatpush1.xpose.msra.mxu0 0.0
    %498 = vmatprep.subr.mxu0 0.0
    %499 = vmatpush1.xpose.msra.mxu0 0.0
    %500 = vmatprep.subr.mxu0 0.0
    %501 = vmatpush1.xpose.msra.mxu0 0.0
    %502 = vmatprep.subr.mxu0 0.0
    %503 = vmatpush1.xpose.msra.mxu0 0.0
    %504 = vmatprep.subr.mxu0 0.0
    %505 = vmatpush1.xpose.msra.mxu0 %v472
    %506 = vmatprep.subr.mxu0 0.0
    %507 = vmatpush2.xpose.msra.mxu0 0.0
    %508 = vmatprep.subr.mxu0 0.0
    %509 = vmatpush2.xpose.msra.mxu0 0.0
    %510 = vmatprep.subr.mxu0 0.0
    %511 = vmatpush2.xpose.msra.mxu0 0.0
    %512 = vmatprep.subr.mxu0 0.0
    %513 = vmatpush2.xpose.msra.mxu0 0.0
    %514 = vmatprep.subr.mxu0 0.0
    %515 = vmatpush2.xpose.msra.mxu0 0.0
    %516 = vmatprep.subr.mxu0 0.0
    %517 = vmatpush2.xpose.msra.mxu0 0.0
    %518 = vmatprep.subr.mxu0 0.0
    %519 = vmatpush2.xpose.msra.mxu0 0.0
    %520 = vmatprep.subr.mxu0 0.0
    %521 = vmatpush2.xpose.msra.mxu0 0.0
    %522 = vmatprep.subr.mxu0 0.0
    %523 = vmatpush2.xpose.msra.mxu0 0.0
    %524 = vmatprep.subr.mxu0 0.0
    %525 = vmatpush2.xpose.msra.mxu0 0.0
    %526 = vmatprep.subr.mxu0 0.0
    %527 = vmatpush2.xpose.msra.mxu0 0.0
    %528 = vmatprep.subr.mxu0 0.0
    %529 = vmatpush2.xpose.msra.mxu0 0.0
    %530 = vmatprep.subr.mxu0 0.0
    %531 = vmatpush2.xpose.msra.mxu0 0.0
    %532 = vmatprep.subr.mxu0 0.0
    %533 = vmatpush2.xpose.msra.mxu0 0.0
    %534 = vmatprep.subr.mxu0 0.0
    %535 = vmatpush2.xpose.msra.mxu0 0.0
    %536 = vmatprep.subr.mxu0 0.0
    %537 = vmatpush2.xpose.msra.mxu0 0.0
    %538 = vmatprep.mubr.f32.mxu0 0.0
    %539 = vmatmul.mubr.f32.gmra.mxu0 %v470
    %v540 = vpop.f32.mrf.mxu0
    %v541 = vadd.f32 0.0, %v540
    %v542 = vpop.f32.mrf.mxu0
    %543 = vdwg.mxu0
    %544 = vrot.lane.b32.xlu0 %v130, 120
    %v545 = vpop.permute.xlu0 %544
    %546 = vrot.lane.b32.xlu0 %v130, 88
    %v547 = vpop.permute.xlu0 %546
    %v548 = vsel %vm136, %v545, 0
    %v550 = vsel %vm136, %v547, 0
    %552 = vmatprep.subr.mxu0 0.0
    %553 = vmatpush1.xpose.msra.mxu0 0.0
    %554 = vmatprep.subr.mxu0 0.0
    %555 = vmatpush1.xpose.msra.mxu0 0.0
    %556 = vmatprep.subr.mxu0 0.0
    %557 = vmatpush1.xpose.msra.mxu0 0.0
    %558 = vmatprep.subr.mxu0 0.0
    %559 = vmatpush1.xpose.msra.mxu0 0.0
    %560 = vmatprep.subr.mxu0 0.0
    %561 = vmatpush1.xpose.msra.mxu0 0.0
    %562 = vmatprep.subr.mxu0 0.0
    %563 = vmatpush1.xpose.msra.mxu0 0.0
    %564 = vmatprep.subr.mxu0 0.0
    %565 = vmatpush1.xpose.msra.mxu0 0.0
    %566 = vmatprep.subr.mxu0 0.0
    %567 = vmatpush1.xpose.msra.mxu0 0.0
    %568 = vmatprep.subr.mxu0 0.0
    %569 = vmatpush1.xpose.msra.mxu0 0.0
    %570 = vmatprep.subr.mxu0 0.0
    %571 = vmatpush1.xpose.msra.mxu0 0.0
    %572 = vmatprep.subr.mxu0 0.0
    %573 = vmatpush1.xpose.msra.mxu0 0.0
    %574 = vmatprep.subr.mxu0 0.0
    %575 = vmatpush1.xpose.msra.mxu0 0.0
    %576 = vmatprep.subr.mxu0 0.0
    %577 = vmatpush1.xpose.msra.mxu0 0.0
    %578 = vmatprep.subr.mxu0 0.0
    %579 = vmatpush1.xpose.msra.mxu0 0.0
    %580 = vmatprep.subr.mxu0 0.0
    %581 = vmatpush1.xpose.msra.mxu0 0.0
    %582 = vmatprep.subr.mxu0 0.0
    %583 = vmatpush1.xpose.msra.mxu0 %v550
    %584 = vmatprep.subr.mxu0 0.0
    %585 = vmatpush2.xpose.msra.mxu0 0.0
    %586 = vmatprep.subr.mxu0 0.0
    %587 = vmatpush2.xpose.msra.mxu0 0.0
    %588 = vmatprep.subr.mxu0 0.0
    %589 = vmatpush2.xpose.msra.mxu0 0.0
    %590 = vmatprep.subr.mxu0 0.0
    %591 = vmatpush2.xpose.msra.mxu0 0.0
    %592 = vmatprep.subr.mxu0 0.0
    %593 = vmatpush2.xpose.msra.mxu0 0.0
    %594 = vmatprep.subr.mxu0 0.0
    %595 = vmatpush2.xpose.msra.mxu0 0.0
    %596 = vmatprep.subr.mxu0 0.0
    %597 = vmatpush2.xpose.msra.mxu0 0.0
    %598 = vmatprep.subr.mxu0 0.0
    %599 = vmatpush2.xpose.msra.mxu0 0.0
    %600 = vmatprep.subr.mxu0 0.0
    %601 = vmatpush2.xpose.msra.mxu0 0.0
    %602 = vmatprep.subr.mxu0 0.0
    %603 = vmatpush2.xpose.msra.mxu0 0.0
    %604 = vmatprep.subr.mxu0 0.0
    %605 = vmatpush2.xpose.msra.mxu0 0.0
    %606 = vmatprep.subr.mxu0 0.0
    %607 = vmatpush2.xpose.msra.mxu0 0.0
    %608 = vmatprep.subr.mxu0 0.0
    %609 = vmatpush2.xpose.msra.mxu0 0.0
    %610 = vmatprep.subr.mxu0 0.0
    %611 = vmatpush2.xpose.msra.mxu0 0.0
    %612 = vmatprep.subr.mxu0 0.0
    %613 = vmatpush2.xpose.msra.mxu0 0.0
    %614 = vmatprep.subr.mxu0 0.0
    %615 = vmatpush2.xpose.msra.mxu0 0.0
    %616 = vmatprep.mubr.f32.mxu0 0.0
    %617 = vmatmul.mubr.f32.gmra.mxu0 %v548
    %v618 = vpop.f32.mrf.mxu0
    %v619 = vadd.f32 0.0, %v618
    %v620 = vpop.f32.mrf.mxu0
    %621 = vdwg.mxu0
    %v622 = vmul.f32 %v541, 0.35355338
    %v623 = vmul.f32 %v619, 0.35355338
    %v624 = vsel %vm136, %v622, -inf
    %625 = vmax.xlane.f32.xlu0 %v624
    %v626 = vpop.xlane.xlu0 %625
    %v627 = vsel %vm136, %v623, -inf
    %628 = vmax.xlane.f32.xlu0 %v627
    %v629 = vpop.xlane.xlu0 %628
    %v630 = vsub.f32 %v622, %v626
    %v631 = vsub.f32 %v623, %v629
    %v632 = vmul.f32 %v630, 1.442695
    %v633 = vpow.pop %v632
    %v634 = vmul.f32 %v631, 1.442695
    %v635 = vpow.pop %v634
    %v636 = vsel %vm136, %v633, 0.0
    %637 = vadd.xlane.f32.xlu0 %v636
    %v638 = vpop.xlane.xlu0 %637
    %v639 = vsel %vm136, %v635, 0.0
    %640 = vadd.xlane.f32.xlu0 %v639
    %v641 = vpop.xlane.xlu0 %640
    %v642 = vrcp.pop %v638
    %v643 = vmul.f32 %v633, %v642
    %v644 = vrcp.pop %v641
    %v645 = vmul.f32 %v635, %v644
    %s646 = scalar_lea.vmem [#allocation4], 16
    %647 = vst.msk [vmem:[%s646] sm:$0xff] %vm136, %v643
    %648 = vst.msk [vmem:[%s646 + $0x8] sm:$0xff] %vm136, %v645
    %649 = vrot.lane.b32.xlu0 %v125, 56
    %v650 = vpop.permute.xlu0 %649
    %v653 = vsel %vm136, %v643, 0
    %655 = vmatprep.subr.mxu0 0.0
    %656 = vmatpush1.msra.mxu0 0.0
    %657 = vmatprep.subr.mxu0 0.0
    %658 = vmatpush1.msra.mxu0 0.0
    %659 = vmatprep.subr.mxu0 0.0
    %660 = vmatpush1.msra.mxu0 0.0
    %661 = vmatprep.subr.mxu0 0.0
    %662 = vmatpush1.msra.mxu0 0.0
    %663 = vmatprep.subr.mxu0 0.0
    %664 = vmatpush1.msra.mxu0 0.0
    %665 = vmatprep.subr.mxu0 0.0
    %666 = vmatpush1.msra.mxu0 0.0
    %667 = vmatprep.subr.mxu0 0.0
    %668 = vmatpush1.msra.mxu0 0.0
    %669 = vmatprep.subr.mxu0 0.0
    %670 = vmatpush1.msra.mxu0 0.0
    %671 = vmatprep.subr.mxu0 0.0
    %672 = vmatpush1.msra.mxu0 0.0
    %673 = vmatprep.subr.mxu0 0.0
    %674 = vmatpush1.msra.mxu0 0.0
    %675 = vmatprep.subr.mxu0 0.0
    %676 = vmatpush1.msra.mxu0 0.0
    %677 = vmatprep.subr.mxu0 0.0
    %678 = vmatpush1.msra.mxu0 0.0
    %679 = vmatprep.subr.mxu0 0.0
    %680 = vmatpush1.msra.mxu0 0.0
    %681 = vmatprep.subr.mxu0 0.0
    %682 = vmatpush1.msra.mxu0 0.0
    %683 = vmatprep.subr.mxu0 0.0
    %684 = vmatpush1.msra.mxu0 0.0
    %685 = vmatprep.subr.mxu0 0.0
    %686 = vmatpush1.msra.mxu0 %v650
    %687 = vmatprep.subr.mxu0 0.0
    %688 = vmatpush2.msra.mxu0 0.0
    %689 = vmatprep.subr.mxu0 0.0
    %690 = vmatpush2.msra.mxu0 0.0
    %691 = vmatprep.subr.mxu0 0.0
    %692 = vmatpush2.msra.mxu0 0.0
    %693 = vmatprep.subr.mxu0 0.0
    %694 = vmatpush2.msra.mxu0 0.0
    %695 = vmatprep.subr.mxu0 0.0
    %696 = vmatpush2.msra.mxu0 0.0
    %697 = vmatprep.subr.mxu0 0.0
    %698 = vmatpush2.msra.mxu0 0.0
    %699 = vmatprep.subr.mxu0 0.0
    %700 = vmatpush2.msra.mxu0 0.0
    %701 = vmatprep.subr.mxu0 0.0
    %702 = vmatpush2.msra.mxu0 0.0
    %703 = vmatprep.subr.mxu0 0.0
    %704 = vmatpush2.msra.mxu0 0.0
    %705 = vmatprep.subr.mxu0 0.0
    %706 = vmatpush2.msra.mxu0 0.0
    %707 = vmatprep.subr.mxu0 0.0
    %708 = vmatpush2.msra.mxu0 0.0
    %709 = vmatprep.subr.mxu0 0.0
    %710 = vmatpush2.msra.mxu0 0.0
    %711 = vmatprep.subr.mxu0 0.0
    %712 = vmatpush2.msra.mxu0 0.0
    %713 = vmatprep.subr.mxu0 0.0
    %714 = vmatpush2.msra.mxu0 0.0
    %715 = vmatprep.subr.mxu0 0.0
    %716 = vmatpush2.msra.mxu0 0.0
    %717 = vmatprep.subr.mxu0 0.0
    %718 = vmatpush2.msra.mxu0 0.0
    %719 = vmatprep.mubr.f32.mxu0 0.0
    %720 = vmatmul.mubr.f32.gmra.mxu0 %v653
    %v721 = vpop.f32.mrf.mxu0
    %v722 = vadd.f32 0.0, %v721
    %v723 = vpop.f32.mrf.mxu0
    %724 = vdwg.mxu0
    %725 = vrot.lane.b32.xlu0 %v130, 56
    %v726 = vpop.permute.xlu0 %725
    %v729 = vsel %vm136, %v645, 0
    %731 = vmatprep.subr.mxu0 0.0
    %732 = vmatpush1.msra.mxu0 0.0
    %733 = vmatprep.subr.mxu0 0.0
    %734 = vmatpush1.msra.mxu0 0.0
    %735 = vmatprep.subr.mxu0 0.0
    %736 = vmatpush1.msra.mxu0 0.0
    %737 = vmatprep.subr.mxu0 0.0
    %738 = vmatpush1.msra.mxu0 0.0
    %739 = vmatprep.subr.mxu0 0.0
    %740 = vmatpush1.msra.mxu0 0.0
    %741 = vmatprep.subr.mxu0 0.0
    %742 = vmatpush1.msra.mxu0 0.0
    %743 = vmatprep.subr.mxu0 0.0
    %744 = vmatpush1.msra.mxu0 0.0
    %745 = vmatprep.subr.mxu0 0.0
    %746 = vmatpush1.msra.mxu0 0.0
    %747 = vmatprep.subr.mxu0 0.0
    %748 = vmatpush1.msra.mxu0 0.0
    %749 = vmatprep.subr.mxu0 0.0
    %750 = vmatpush1.msra.mxu0 0.0
    %751 = vmatprep.subr.mxu0 0.0
    %752 = vmatpush1.msra.mxu0 0.0
    %753 = vmatprep.subr.mxu0 0.0
    %754 = vmatpush1.msra.mxu0 0.0
    %755 = vmatprep.subr.mxu0 0.0
    %756 = vmatpush1.msra.mxu0 0.0
    %757 = vmatprep.subr.mxu0 0.0
    %758 = vmatpush1.msra.mxu0 0.0
    %759 = vmatprep.subr.mxu0 0.0
    %760 = vmatpush1.msra.mxu0 0.0
    %761 = vmatprep.subr.mxu0 0.0
    %762 = vmatpush1.msra.mxu0 %v726
    %763 = vmatprep.subr.mxu0 0.0
    %764 = vmatpush2.msra.mxu0 0.0
    %765 = vmatprep.subr.mxu0 0.0
    %766 = vmatpush2.msra.mxu0 0.0
    %767 = vmatprep.subr.mxu0 0.0
    %768 = vmatpush2.msra.mxu0 0.0
    %769 = vmatprep.subr.mxu0 0.0
    %770 = vmatpush2.msra.mxu0 0.0
    %771 = vmatprep.subr.mxu0 0.0
    %772 = vmatpush2.msra.mxu0 0.0
    %773 = vmatprep.subr.mxu0 0.0
    %774 = vmatpush2.msra.mxu0 0.0
    %775 = vmatprep.subr.mxu0 0.0
    %776 = vmatpush2.msra.mxu0 0.0
    %777 = vmatprep.subr.mxu0 0.0
    %778 = vmatpush2.msra.mxu0 0.0
    %779 = vmatprep.subr.mxu0 0.0
    %780 = vmatpush2.msra.mxu0 0.0
    %781 = vmatprep.subr.mxu0 0.0
    %782 = vmatpush2.msra.mxu0 0.0
    %783 = vmatprep.subr.mxu0 0.0
    %784 = vmatpush2.msra.mxu0 0.0
    %785 = vmatprep.subr.mxu0 0.0
    %786 = vmatpush2.msra.mxu0 0.0
    %787 = vmatprep.subr.mxu0 0.0
    %788 = vmatpush2.msra.mxu0 0.0
    %789 = vmatprep.subr.mxu0 0.0
    %790 = vmatpush2.msra.mxu0 0.0
    %791 = vmatprep.subr.mxu0 0.0
    %792 = vmatpush2.msra.mxu0 0.0
    %793 = vmatprep.subr.mxu0 0.0
    %794 = vmatpush2.msra.mxu0 0.0
    %795 = vmatprep.mubr.f32.mxu0 0.0
    %796 = vmatmul.mubr.f32.gmra.mxu0 %v729
    %v797 = vpop.f32.mrf.mxu0
    %v798 = vadd.f32 0.0, %v797
    %v799 = vpop.f32.mrf.mxu0
    %800 = vdwg.mxu0
    %801 = vrot.lane.b32.xlu0 %v125, 112
    %v802 = vpop.permute.xlu0 %801
    %803 = vrot.lane.b32.xlu0 %v125, 80
    %v804 = vpop.permute.xlu0 %803
    %v805 = vsel %vm136, %v802, 0
    %v807 = vsel %vm136, %v804, 0
    %809 = vmatprep.subr.mxu0 0.0
    %810 = vmatpush1.xpose.msra.mxu0 0.0
    %811 = vmatprep.subr.mxu0 0.0
    %812 = vmatpush1.xpose.msra.mxu0 0.0
    %813 = vmatprep.subr.mxu0 0.0
    %814 = vmatpush1.xpose.msra.mxu0 0.0
    %815 = vmatprep.subr.mxu0 0.0
    %816 = vmatpush1.xpose.msra.mxu0 0.0
    %817 = vmatprep.subr.mxu0 0.0
    %818 = vmatpush1.xpose.msra.mxu0 0.0
    %819 = vmatprep.subr.mxu0 0.0
    %820 = vmatpush1.xpose.msra.mxu0 0.0
    %821 = vmatprep.subr.mxu0 0.0
    %822 = vmatpush1.xpose.msra.mxu0 0.0
    %823 = vmatprep.subr.mxu0 0.0
    %824 = vmatpush1.xpose.msra.mxu0 0.0
    %825 = vmatprep.subr.mxu0 0.0
    %826 = vmatpush1.xpose.msra.mxu0 0.0
    %827 = vmatprep.subr.mxu0 0.0
    %828 = vmatpush1.xpose.msra.mxu0 0.0
    %829 = vmatprep.subr.mxu0 0.0
    %830 = vmatpush1.xpose.msra.mxu0 0.0
    %831 = vmatprep.subr.mxu0 0.0
    %832 = vmatpush1.xpose.msra.mxu0 0.0
    %833 = vmatprep.subr.mxu0 0.0
    %834 = vmatpush1.xpose.msra.mxu0 0.0
    %835 = vmatprep.subr.mxu0 0.0
    %836 = vmatpush1.xpose.msra.mxu0 0.0
    %837 = vmatprep.subr.mxu0 0.0
    %838 = vmatpush1.xpose.msra.mxu0 0.0
    %839 = vmatprep.subr.mxu0 0.0
    %840 = vmatpush1.xpose.msra.mxu0 %v807
    %841 = vmatprep.subr.mxu0 0.0
    %842 = vmatpush2.xpose.msra.mxu0 0.0
    %843 = vmatprep.subr.mxu0 0.0
    %844 = vmatpush2.xpose.msra.mxu0 0.0
    %845 = vmatprep.subr.mxu0 0.0
    %846 = vmatpush2.xpose.msra.mxu0 0.0
    %847 = vmatprep.subr.mxu0 0.0
    %848 = vmatpush2.xpose.msra.mxu0 0.0
    %849 = vmatprep.subr.mxu0 0.0
    %850 = vmatpush2.xpose.msra.mxu0 0.0
    %851 = vmatprep.subr.mxu0 0.0
    %852 = vmatpush2.xpose.msra.mxu0 0.0
    %853 = vmatprep.subr.mxu0 0.0
    %854 = vmatpush2.xpose.msra.mxu0 0.0
    %855 = vmatprep.subr.mxu0 0.0
    %856 = vmatpush2.xpose.msra.mxu0 0.0
    %857 = vmatprep.subr.mxu0 0.0
    %858 = vmatpush2.xpose.msra.mxu0 0.0
    %859 = vmatprep.subr.mxu0 0.0
    %860 = vmatpush2.xpose.msra.mxu0 0.0
    %861 = vmatprep.subr.mxu0 0.0
    %862 = vmatpush2.xpose.msra.mxu0 0.0
    %863 = vmatprep.subr.mxu0 0.0
    %864 = vmatpush2.xpose.msra.mxu0 0.0
    %865 = vmatprep.subr.mxu0 0.0
    %866 = vmatpush2.xpose.msra.mxu0 0.0
    %867 = vmatprep.subr.mxu0 0.0
    %868 = vmatpush2.xpose.msra.mxu0 0.0
    %869 = vmatprep.subr.mxu0 0.0
    %870 = vmatpush2.xpose.msra.mxu0 0.0
    %871 = vmatprep.subr.mxu0 0.0
    %872 = vmatpush2.xpose.msra.mxu0 0.0
    %873 = vmatprep.mubr.f32.mxu0 0.0
    %874 = vmatmul.mubr.f32.gmra.mxu0 %v805
    %v875 = vpop.f32.mrf.mxu0
    %v876 = vadd.f32 0.0, %v875
    %v877 = vpop.f32.mrf.mxu0
    %878 = vdwg.mxu0
    %879 = vrot.lane.b32.xlu0 %v130, 112
    %v880 = vpop.permute.xlu0 %879
    %881 = vrot.lane.b32.xlu0 %v130, 80
    %v882 = vpop.permute.xlu0 %881
    %v883 = vsel %vm136, %v880, 0
    %v885 = vsel %vm136, %v882, 0
    %887 = vmatprep.subr.mxu0 0.0
    %888 = vmatpush1.xpose.msra.mxu0 0.0
    %889 = vmatprep.subr.mxu0 0.0
    %890 = vmatpush1.xpose.msra.mxu0 0.0
    %891 = vmatprep.subr.mxu0 0.0
    %892 = vmatpush1.xpose.msra.mxu0 0.0
    %893 = vmatprep.subr.mxu0 0.0
    %894 = vmatpush1.xpose.msra.mxu0 0.0
    %895 = vmatprep.subr.mxu0 0.0
    %896 = vmatpush1.xpose.msra.mxu0 0.0
    %897 = vmatprep.subr.mxu0 0.0
    %898 = vmatpush1.xpose.msra.mxu0 0.0
    %899 = vmatprep.subr.mxu0 0.0
    %900 = vmatpush1.xpose.msra.mxu0 0.0
    %901 = vmatprep.subr.mxu0 0.0
    %902 = vmatpush1.xpose.msra.mxu0 0.0
    %903 = vmatprep.subr.mxu0 0.0
    %904 = vmatpush1.xpose.msra.mxu0 0.0
    %905 = vmatprep.subr.mxu0 0.0
    %906 = vmatpush1.xpose.msra.mxu0 0.0
    %907 = vmatprep.subr.mxu0 0.0
    %908 = vmatpush1.xpose.msra.mxu0 0.0
    %909 = vmatprep.subr.mxu0 0.0
    %910 = vmatpush1.xpose.msra.mxu0 0.0
    %911 = vmatprep.subr.mxu0 0.0
    %912 = vmatpush1.xpose.msra.mxu0 0.0
    %913 = vmatprep.subr.mxu0 0.0
    %914 = vmatpush1.xpose.msra.mxu0 0.0
    %915 = vmatprep.subr.mxu0 0.0
    %916 = vmatpush1.xpose.msra.mxu0 0.0
    %917 = vmatprep.subr.mxu0 0.0
    %918 = vmatpush1.xpose.msra.mxu0 %v885
    %919 = vmatprep.subr.mxu0 0.0
    %920 = vmatpush2.xpose.msra.mxu0 0.0
    %921 = vmatprep.subr.mxu0 0.0
    %922 = vmatpush2.xpose.msra.mxu0 0.0
    %923 = vmatprep.subr.mxu0 0.0
    %924 = vmatpush2.xpose.msra.mxu0 0.0
    %925 = vmatprep.subr.mxu0 0.0
    %926 = vmatpush2.xpose.msra.mxu0 0.0
    %927 = vmatprep.subr.mxu0 0.0
    %928 = vmatpush2.xpose.msra.mxu0 0.0
    %929 = vmatprep.subr.mxu0 0.0
    %930 = vmatpush2.xpose.msra.mxu0 0.0
    %931 = vmatprep.subr.mxu0 0.0
    %932 = vmatpush2.xpose.msra.mxu0 0.0
    %933 = vmatprep.subr.mxu0 0.0
    %934 = vmatpush2.xpose.msra.mxu0 0.0
    %935 = vmatprep.subr.mxu0 0.0
    %936 = vmatpush2.xpose.msra.mxu0 0.0
    %937 = vmatprep.subr.mxu0 0.0
    %938 = vmatpush2.xpose.msra.mxu0 0.0
    %939 = vmatprep.subr.mxu0 0.0
    %940 = vmatpush2.xpose.msra.mxu0 0.0
    %941 = vmatprep.subr.mxu0 0.0
    %942 = vmatpush2.xpose.msra.mxu0 0.0
    %943 = vmatprep.subr.mxu0 0.0
    %944 = vmatpush2.xpose.msra.mxu0 0.0
    %945 = vmatprep.subr.mxu0 0.0
    %946 = vmatpush2.xpose.msra.mxu0 0.0
    %947 = vmatprep.subr.mxu0 0.0
    %948 = vmatpush2.xpose.msra.mxu0 0.0
    %949 = vmatprep.subr.mxu0 0.0
    %950 = vmatpush2.xpose.msra.mxu0 0.0
    %951 = vmatprep.mubr.f32.mxu0 0.0
    %952 = vmatmul.mubr.f32.gmra.mxu0 %v883
    %v953 = vpop.f32.mrf.mxu0
    %v954 = vadd.f32 0.0, %v953
    %v955 = vpop.f32.mrf.mxu0
    %956 = vdwg.mxu0
    %v957 = vmul.f32 %v876, 0.35355338
    %v958 = vmul.f32 %v954, 0.35355338
    %v959 = vsel %vm136, %v957, -inf
    %960 = vmax.xlane.f32.xlu0 %v959
    %v961 = vpop.xlane.xlu0 %960
    %v962 = vsel %vm136, %v958, -inf
    %963 = vmax.xlane.f32.xlu0 %v962
    %v964 = vpop.xlane.xlu0 %963
    %v965 = vsub.f32 %v957, %v961
    %v966 = vsub.f32 %v958, %v964
    %v967 = vmul.f32 %v965, 1.442695
    %v968 = vpow.pop %v967
    %v969 = vmul.f32 %v966, 1.442695
    %v970 = vpow.pop %v969
    %v971 = vsel %vm136, %v968, 0.0
    %972 = vadd.xlane.f32.xlu0 %v971
    %v973 = vpop.xlane.xlu0 %972
    %v974 = vsel %vm136, %v970, 0.0
    %975 = vadd.xlane.f32.xlu0 %v974
    %v976 = vpop.xlane.xlu0 %975
    %v977 = vrcp.pop %v973
    %v978 = vmul.f32 %v968, %v977
    %v979 = vrcp.pop %v976
    %v980 = vmul.f32 %v970, %v979
    %s981 = scalar_lea.vmem [#allocation4], 32
    %982 = vst.msk [vmem:[%s981] sm:$0xff] %vm136, %v978
    %983 = vst.msk [vmem:[%s981 + $0x8] sm:$0xff] %vm136, %v980
    %984 = vrot.lane.b32.xlu0 %v125, 48
    %v985 = vpop.permute.xlu0 %984
    %v988 = vsel %vm136, %v978, 0
    %990 = vmatprep.subr.mxu0 0.0
    %991 = vmatpush1.msra.mxu0 0.0
    %992 = vmatprep.subr.mxu0 0.0
    %993 = vmatpush1.msra.mxu0 0.0
    %994 = vmatprep.subr.mxu0 0.0
    %995 = vmatpush1.msra.mxu0 0.0
    %996 = vmatprep.subr.mxu0 0.0
    %997 = vmatpush1.msra.mxu0 0.0
    %998 = vmatprep.subr.mxu0 0.0
    %999 = vmatpush1.msra.mxu0 0.0
    %1000 = vmatprep.subr.mxu0 0.0
    %1001 = vmatpush1.msra.mxu0 0.0
    %1002 = vmatprep.subr.mxu0 0.0
    %1003 = vmatpush1.msra.mxu0 0.0
    %1004 = vmatprep.subr.mxu0 0.0
    %1005 = vmatpush1.msra.mxu0 0.0
    %1006 = vmatprep.subr.mxu0 0.0
    %1007 = vmatpush1.msra.mxu0 0.0
    %1008 = vmatprep.subr.mxu0 0.0
    %1009 = vmatpush1.msra.mxu0 0.0
    %1010 = vmatprep.subr.mxu0 0.0
    %1011 = vmatpush1.msra.mxu0 0.0
    %1012 = vmatprep.subr.mxu0 0.0
    %1013 = vmatpush1.msra.mxu0 0.0
    %1014 = vmatprep.subr.mxu0 0.0
    %1015 = vmatpush1.msra.mxu0 0.0
    %1016 = vmatprep.subr.mxu0 0.0
    %1017 = vmatpush1.msra.mxu0 0.0
    %1018 = vmatprep.subr.mxu0 0.0
    %1019 = vmatpush1.msra.mxu0 0.0
    %1020 = vmatprep.subr.mxu0 0.0
    %1021 = vmatpush1.msra.mxu0 %v985
    %1022 = vmatprep.subr.mxu0 0.0
    %1023 = vmatpush2.msra.mxu0 0.0
    %1024 = vmatprep.subr.mxu0 0.0
    %1025 = vmatpush2.msra.mxu0 0.0
    %1026 = vmatprep.subr.mxu0 0.0
    %1027 = vmatpush2.msra.mxu0 0.0
    %1028 = vmatprep.subr.mxu0 0.0
    %1029 = vmatpush2.msra.mxu0 0.0
    %1030 = vmatprep.subr.mxu0 0.0
    %1031 = vmatpush2.msra.mxu0 0.0
    %1032 = vmatprep.subr.mxu0 0.0
    %1033 = vmatpush2.msra.mxu0 0.0
    %1034 = vmatprep.subr.mxu0 0.0
    %1035 = vmatpush2.msra.mxu0 0.0
    %1036 = vmatprep.subr.mxu0 0.0
    %1037 = vmatpush2.msra.mxu0 0.0
    %1038 = vmatprep.subr.mxu0 0.0
    %1039 = vmatpush2.msra.mxu0 0.0
    %1040 = vmatprep.subr.mxu0 0.0
    %1041 = vmatpush2.msra.mxu0 0.0
    %1042 = vmatprep.subr.mxu0 0.0
    %1043 = vmatpush2.msra.mxu0 0.0
    %1044 = vmatprep.subr.mxu0 0.0
    %1045 = vmatpush2.msra.mxu0 0.0
    %1046 = vmatprep.subr.mxu0 0.0
    %1047 = vmatpush2.msra.mxu0 0.0
    %1048 = vmatprep.subr.mxu0 0.0
    %1049 = vmatpush2.msra.mxu0 0.0
    %1050 = vmatprep.subr.mxu0 0.0
    %1051 = vmatpush2.msra.mxu0 0.0
    %1052 = vmatprep.subr.mxu0 0.0
    %1053 = vmatpush2.msra.mxu0 0.0
    %1054 = vmatprep.mubr.f32.mxu0 0.0
    %1055 = vmatmul.mubr.f32.gmra.mxu0 %v988
    %v1056 = vpop.f32.mrf.mxu0
    %v1057 = vadd.f32 0.0, %v1056
    %v1058 = vpop.f32.mrf.mxu0
    %1059 = vdwg.mxu0
    %1060 = vrot.lane.b32.xlu0 %v130, 48
    %v1061 = vpop.permute.xlu0 %1060
    %v1064 = vsel %vm136, %v980, 0
    %1066 = vmatprep.subr.mxu0 0.0
    %1067 = vmatpush1.msra.mxu0 0.0
    %1068 = vmatprep.subr.mxu0 0.0
    %1069 = vmatpush1.msra.mxu0 0.0
    %1070 = vmatprep.subr.mxu0 0.0
    %1071 = vmatpush1.msra.mxu0 0.0
    %1072 = vmatprep.subr.mxu0 0.0
    %1073 = vmatpush1.msra.mxu0 0.0
    %1074 = vmatprep.subr.mxu0 0.0
    %1075 = vmatpush1.msra.mxu0 0.0
    %1076 = vmatprep.subr.mxu0 0.0
    %1077 = vmatpush1.msra.mxu0 0.0
    %1078 = vmatprep.subr.mxu0 0.0
    %1079 = vmatpush1.msra.mxu0 0.0
    %1080 = vmatprep.subr.mxu0 0.0
    %1081 = vmatpush1.msra.mxu0 0.0
    %1082 = vmatprep.subr.mxu0 0.0
    %1083 = vmatpush1.msra.mxu0 0.0
    %1084 = vmatprep.subr.mxu0 0.0
    %1085 = vmatpush1.msra.mxu0 0.0
    %1086 = vmatprep.subr.mxu0 0.0
    %1087 = vmatpush1.msra.mxu0 0.0
    %1088 = vmatprep.subr.mxu0 0.0
    %1089 = vmatpush1.msra.mxu0 0.0
    %1090 = vmatprep.subr.mxu0 0.0
    %1091 = vmatpush1.msra.mxu0 0.0
    %1092 = vmatprep.subr.mxu0 0.0
    %1093 = vmatpush1.msra.mxu0 0.0
    %1094 = vmatprep.subr.mxu0 0.0
    %1095 = vmatpush1.msra.mxu0 0.0
    %1096 = vmatprep.subr.mxu0 0.0
    %1097 = vmatpush1.msra.mxu0 %v1061
    %1098 = vmatprep.subr.mxu0 0.0
    %1099 = vmatpush2.msra.mxu0 0.0
    %1100 = vmatprep.subr.mxu0 0.0
    %1101 = vmatpush2.msra.mxu0 0.0
    %1102 = vmatprep.subr.mxu0 0.0
    %1103 = vmatpush2.msra.mxu0 0.0
    %1104 = vmatprep.subr.mxu0 0.0
    %1105 = vmatpush2.msra.mxu0 0.0
    %1106 = vmatprep.subr.mxu0 0.0
    %1107 = vmatpush2.msra.mxu0 0.0
    %1108 = vmatprep.subr.mxu0 0.0
    %1109 = vmatpush2.msra.mxu0 0.0
    %1110 = vmatprep.subr.mxu0 0.0
    %1111 = vmatpush2.msra.mxu0 0.0
    %1112 = vmatprep.subr.mxu0 0.0
    %1113 = vmatpush2.msra.mxu0 0.0
    %1114 = vmatprep.subr.mxu0 0.0
    %1115 = vmatpush2.msra.mxu0 0.0
    %1116 = vmatprep.subr.mxu0 0.0
    %1117 = vmatpush2.msra.mxu0 0.0
    %1118 = vmatprep.subr.mxu0 0.0
    %1119 = vmatpush2.msra.mxu0 0.0
    %1120 = vmatprep.subr.mxu0 0.0
    %1121 = vmatpush2.msra.mxu0 0.0
    %1122 = vmatprep.subr.mxu0 0.0
    %1123 = vmatpush2.msra.mxu0 0.0
    %1124 = vmatprep.subr.mxu0 0.0
    %1125 = vmatpush2.msra.mxu0 0.0
    %1126 = vmatprep.subr.mxu0 0.0
    %1127 = vmatpush2.msra.mxu0 0.0
    %1128 = vmatprep.subr.mxu0 0.0
    %1129 = vmatpush2.msra.mxu0 0.0
    %1130 = vmatprep.mubr.f32.mxu0 0.0
    %1131 = vmatmul.mubr.f32.gmra.mxu0 %v1064
    %v1132 = vpop.f32.mrf.mxu0
    %v1133 = vadd.f32 0.0, %v1132
    %v1134 = vpop.f32.mrf.mxu0
    %1135 = vdwg.mxu0
    %1136 = vrot.lane.b32.xlu0 %v125, 104
    %v1137 = vpop.permute.xlu0 %1136
    %1138 = vrot.lane.b32.xlu0 %v125, 72
    %v1139 = vpop.permute.xlu0 %1138
    %v1140 = vsel %vm136, %v1137, 0
    %v1142 = vsel %vm136, %v1139, 0
    %1144 = vmatprep.subr.mxu0 0.0
    %1145 = vmatpush1.xpose.msra.mxu0 0.0
    %1146 = vmatprep.subr.mxu0 0.0
    %1147 = vmatpush1.xpose.msra.mxu0 0.0
    %1148 = vmatprep.subr.mxu0 0.0
    %1149 = vmatpush1.xpose.msra.mxu0 0.0
    %1150 = vmatprep.subr.mxu0 0.0
    %1151 = vmatpush1.xpose.msra.mxu0 0.0
    %1152 = vmatprep.subr.mxu0 0.0
    %1153 = vmatpush1.xpose.msra.mxu0 0.0
    %1154 = vmatprep.subr.mxu0 0.0
    %1155 = vmatpush1.xpose.msra.mxu0 0.0
    %1156 = vmatprep.subr.mxu0 0.0
    %1157 = vmatpush1.xpose.msra.mxu0 0.0
    %1158 = vmatprep.subr.mxu0 0.0
    %1159 = vmatpush1.xpose.msra.mxu0 0.0
    %1160 = vmatprep.subr.mxu0 0.0
    %1161 = vmatpush1.xpose.msra.mxu0 0.0
    %1162 = vmatprep.subr.mxu0 0.0
    %1163 = vmatpush1.xpose.msra.mxu0 0.0
    %1164 = vmatprep.subr.mxu0 0.0
    %1165 = vmatpush1.xpose.msra.mxu0 0.0
    %1166 = vmatprep.subr.mxu0 0.0
    %1167 = vmatpush1.xpose.msra.mxu0 0.0
    %1168 = vmatprep.subr.mxu0 0.0
    %1169 = vmatpush1.xpose.msra.mxu0 0.0
    %1170 = vmatprep.subr.mxu0 0.0
    %1171 = vmatpush1.xpose.msra.mxu0 0.0
    %1172 = vmatprep.subr.mxu0 0.0
    %1173 = vmatpush1.xpose.msra.mxu0 0.0
    %1174 = vmatprep.subr.mxu0 0.0
    %1175 = vmatpush1.xpose.msra.mxu0 %v1142
    %1176 = vmatprep.subr.mxu0 0.0
    %1177 = vmatpush2.xpose.msra.mxu0 0.0
    %1178 = vmatprep.subr.mxu0 0.0
    %1179 = vmatpush2.xpose.msra.mxu0 0.0
    %1180 = vmatprep.subr.mxu0 0.0
    %1181 = vmatpush2.xpose.msra.mxu0 0.0
    %1182 = vmatprep.subr.mxu0 0.0
    %1183 = vmatpush2.xpose.msra.mxu0 0.0
    %1184 = vmatprep.subr.mxu0 0.0
    %1185 = vmatpush2.xpose.msra.mxu0 0.0
    %1186 = vmatprep.subr.mxu0 0.0
    %1187 = vmatpush2.xpose.msra.mxu0 0.0
    %1188 = vmatprep.subr.mxu0 0.0
    %1189 = vmatpush2.xpose.msra.mxu0 0.0
    %1190 = vmatprep.subr.mxu0 0.0
    %1191 = vmatpush2.xpose.msra.mxu0 0.0
    %1192 = vmatprep.subr.mxu0 0.0
    %1193 = vmatpush2.xpose.msra.mxu0 0.0
    %1194 = vmatprep.subr.mxu0 0.0
    %1195 = vmatpush2.xpose.msra.mxu0 0.0
    %1196 = vmatprep.subr.mxu0 0.0
    %1197 = vmatpush2.xpose.msra.mxu0 0.0
    %1198 = vmatprep.subr.mxu0 0.0
    %1199 = vmatpush2.xpose.msra.mxu0 0.0
    %1200 = vmatprep.subr.mxu0 0.0
    %1201 = vmatpush2.xpose.msra.mxu0 0.0
    %1202 = vmatprep.subr.mxu0 0.0
    %1203 = vmatpush2.xpose.msra.mxu0 0.0
    %1204 = vmatprep.subr.mxu0 0.0
    %1205 = vmatpush2.xpose.msra.mxu0 0.0
    %1206 = vmatprep.subr.mxu0 0.0
    %1207 = vmatpush2.xpose.msra.mxu0 0.0
    %1208 = vmatprep.mubr.f32.mxu0 0.0
    %1209 = vmatmul.mubr.f32.gmra.mxu0 %v1140
    %v1210 = vpop.f32.mrf.mxu0
    %v1211 = vadd.f32 0.0, %v1210
    %v1212 = vpop.f32.mrf.mxu0
    %1213 = vdwg.mxu0
    %1214 = vrot.lane.b32.xlu0 %v130, 104
    %v1215 = vpop.permute.xlu0 %1214
    %1216 = vrot.lane.b32.xlu0 %v130, 72
    %v1217 = vpop.permute.xlu0 %1216
    %v1218 = vsel %vm136, %v1215, 0
    %v1220 = vsel %vm136, %v1217, 0
    %1222 = vmatprep.subr.mxu0 0.0
    %1223 = vmatpush1.xpose.msra.mxu0 0.0
    %1224 = vmatprep.subr.mxu0 0.0
    %1225 = vmatpush1.xpose.msra.mxu0 0.0
    %1226 = vmatprep.subr.mxu0 0.0
    %1227 = vmatpush1.xpose.msra.mxu0 0.0
    %1228 = vmatprep.subr.mxu0 0.0
    %1229 = vmatpush1.xpose.msra.mxu0 0.0
    %1230 = vmatprep.subr.mxu0 0.0
    %1231 = vmatpush1.xpose.msra.mxu0 0.0
    %1232 = vmatprep.subr.mxu0 0.0
    %1233 = vmatpush1.xpose.msra.mxu0 0.0
    %1234 = vmatprep.subr.mxu0 0.0
    %1235 = vmatpush1.xpose.msra.mxu0 0.0
    %1236 = vmatprep.subr.mxu0 0.0
    %1237 = vmatpush1.xpose.msra.mxu0 0.0
    %1238 = vmatprep.subr.mxu0 0.0
    %1239 = vmatpush1.xpose.msra.mxu0 0.0
    %1240 = vmatprep.subr.mxu0 0.0
    %1241 = vmatpush1.xpose.msra.mxu0 0.0
    %1242 = vmatprep.subr.mxu0 0.0
    %1243 = vmatpush1.xpose.msra.mxu0 0.0
    %1244 = vmatprep.subr.mxu0 0.0
    %1245 = vmatpush1.xpose.msra.mxu0 0.0
    %1246 = vmatprep.subr.mxu0 0.0
    %1247 = vmatpush1.xpose.msra.mxu0 0.0
    %1248 = vmatprep.subr.mxu0 0.0
    %1249 = vmatpush1.xpose.msra.mxu0 0.0
    %1250 = vmatprep.subr.mxu0 0.0
    %1251 = vmatpush1.xpose.msra.mxu0 0.0
    %1252 = vmatprep.subr.mxu0 0.0
    %1253 = vmatpush1.xpose.msra.mxu0 %v1220
    %1254 = vmatprep.subr.mxu0 0.0
    %1255 = vmatpush2.xpose.msra.mxu0 0.0
    %1256 = vmatprep.subr.mxu0 0.0
    %1257 = vmatpush2.xpose.msra.mxu0 0.0
    %1258 = vmatprep.subr.mxu0 0.0
    %1259 = vmatpush2.xpose.msra.mxu0 0.0
    %1260 = vmatprep.subr.mxu0 0.0
    %1261 = vmatpush2.xpose.msra.mxu0 0.0
    %1262 = vmatprep.subr.mxu0 0.0
    %1263 = vmatpush2.xpose.msra.mxu0 0.0
    %1264 = vmatprep.subr.mxu0 0.0
    %1265 = vmatpush2.xpose.msra.mxu0 0.0
    %1266 = vmatprep.subr.mxu0 0.0
    %1267 = vmatpush2.xpose.msra.mxu0 0.0
    %1268 = vmatprep.subr.mxu0 0.0
    %1269 = vmatpush2.xpose.msra.mxu0 0.0
    %1270 = vmatprep.subr.mxu0 0.0
    %1271 = vmatpush2.xpose.msra.mxu0 0.0
    %1272 = vmatprep.subr.mxu0 0.0
    %1273 = vmatpush2.xpose.msra.mxu0 0.0
    %1274 = vmatprep.subr.mxu0 0.0
    %1275 = vmatpush2.xpose.msra.mxu0 0.0
    %1276 = vmatprep.subr.mxu0 0.0
    %1277 = vmatpush2.xpose.msra.mxu0 0.0
    %1278 = vmatprep.subr.mxu0 0.0
    %1279 = vmatpush2.xpose.msra.mxu0 0.0
    %1280 = vmatprep.subr.mxu0 0.0
    %1281 = vmatpush2.xpose.msra.mxu0 0.0
    %1282 = vmatprep.subr.mxu0 0.0
    %1283 = vmatpush2.xpose.msra.mxu0 0.0
    %1284 = vmatprep.subr.mxu0 0.0
    %1285 = vmatpush2.xpose.msra.mxu0 0.0
    %1286 = vmatprep.mubr.f32.mxu0 0.0
    %1287 = vmatmul.mubr.f32.gmra.mxu0 %v1218
    %v1288 = vpop.f32.mrf.mxu0
    %v1289 = vadd.f32 0.0, %v1288
    %v1290 = vpop.f32.mrf.mxu0
    %1291 = vdwg.mxu0
    %v1292 = vmul.f32 %v1211, 0.35355338
    %v1293 = vmul.f32 %v1289, 0.35355338
    %v1294 = vsel %vm136, %v1292, -inf
    %1295 = vmax.xlane.f32.xlu0 %v1294
    %v1296 = vpop.xlane.xlu0 %1295
    %v1297 = vsel %vm136, %v1293, -inf
    %1298 = vmax.xlane.f32.xlu0 %v1297
    %v1299 = vpop.xlane.xlu0 %1298
    %v1300 = vsub.f32 %v1292, %v1296
    %v1301 = vsub.f32 %v1293, %v1299
    %v1302 = vmul.f32 %v1300, 1.442695
    %v1303 = vpow.pop %v1302
    %v1304 = vmul.f32 %v1301, 1.442695
    %v1305 = vpow.pop %v1304
    %v1306 = vsel %vm136, %v1303, 0.0
    %1307 = vadd.xlane.f32.xlu0 %v1306
    %v1308 = vpop.xlane.xlu0 %1307
    %v1309 = vsel %vm136, %v1305, 0.0
    %1310 = vadd.xlane.f32.xlu0 %v1309
    %v1311 = vpop.xlane.xlu0 %1310
    %v1312 = vrcp.pop %v1308
    %v1313 = vmul.f32 %v1303, %v1312
    %v1314 = vrcp.pop %v1311
    %v1315 = vmul.f32 %v1305, %v1314
    %s1316 = scalar_lea.vmem [#allocation4], 48
    %1317 = vst.msk [vmem:[%s1316] sm:$0xff] %vm136, %v1313
    %1318 = vst.msk [vmem:[%s1316 + $0x8] sm:$0xff] %vm136, %v1315
    %1319 = vrot.lane.b32.xlu0 %v125, 40
    %v1320 = vpop.permute.xlu0 %1319
    %v1323 = vsel %vm136, %v1313, 0
    %1325 = vmatprep.subr.mxu0 0.0
    %1326 = vmatpush1.msra.mxu0 0.0
    %1327 = vmatprep.subr.mxu0 0.0
    %1328 = vmatpush1.msra.mxu0 0.0
    %1329 = vmatprep.subr.mxu0 0.0
    %1330 = vmatpush1.msra.mxu0 0.0
    %1331 = vmatprep.subr.mxu0 0.0
    %1332 = vmatpush1.msra.mxu0 0.0
    %1333 = vmatprep.subr.mxu0 0.0
    %1334 = vmatpush1.msra.mxu0 0.0
    %1335 = vmatprep.subr.mxu0 0.0
    %1336 = vmatpush1.msra.mxu0 0.0
    %1337 = vmatprep.subr.mxu0 0.0
    %1338 = vmatpush1.msra.mxu0 0.0
    %1339 = vmatprep.subr.mxu0 0.0
    %1340 = vmatpush1.msra.mxu0 0.0
    %1341 = vmatprep.subr.mxu0 0.0
    %1342 = vmatpush1.msra.mxu0 0.0
    %1343 = vmatprep.subr.mxu0 0.0
    %1344 = vmatpush1.msra.mxu0 0.0
    %1345 = vmatprep.subr.mxu0 0.0
    %1346 = vmatpush1.msra.mxu0 0.0
    %1347 = vmatprep.subr.mxu0 0.0
    %1348 = vmatpush1.msra.mxu0 0.0
    %1349 = vmatprep.subr.mxu0 0.0
    %1350 = vmatpush1.msra.mxu0 0.0
    %1351 = vmatprep.subr.mxu0 0.0
    %1352 = vmatpush1.msra.mxu0 0.0
    %1353 = vmatprep.subr.mxu0 0.0
    %1354 = vmatpush1.msra.mxu0 0.0
    %1355 = vmatprep.subr.mxu0 0.0
    %1356 = vmatpush1.msra.mxu0 %v1320
    %1357 = vmatprep.subr.mxu0 0.0
    %1358 = vmatpush2.msra.mxu0 0.0
    %1359 = vmatprep.subr.mxu0 0.0
    %1360 = vmatpush2.msra.mxu0 0.0
    %1361 = vmatprep.subr.mxu0 0.0
    %1362 = vmatpush2.msra.mxu0 0.0
    %1363 = vmatprep.subr.mxu0 0.0
    %1364 = vmatpush2.msra.mxu0 0.0
    %1365 = vmatprep.subr.mxu0 0.0
    %1366 = vmatpush2.msra.mxu0 0.0
    %1367 = vmatprep.subr.mxu0 0.0
    %1368 = vmatpush2.msra.mxu0 0.0
    %1369 = vmatprep.subr.mxu0 0.0
    %1370 = vmatpush2.msra.mxu0 0.0
    %1371 = vmatprep.subr.mxu0 0.0
    %1372 = vmatpush2.msra.mxu0 0.0
    %1373 = vmatprep.subr.mxu0 0.0
    %1374 = vmatpush2.msra.mxu0 0.0
    %1375 = vmatprep.subr.mxu0 0.0
    %1376 = vmatpush2.msra.mxu0 0.0
    %1377 = vmatprep.subr.mxu0 0.0
    %1378 = vmatpush2.msra.mxu0 0.0
    %1379 = vmatprep.subr.mxu0 0.0
    %1380 = vmatpush2.msra.mxu0 0.0
    %1381 = vmatprep.subr.mxu0 0.0
    %1382 = vmatpush2.msra.mxu0 0.0
    %1383 = vmatprep.subr.mxu0 0.0
    %1384 = vmatpush2.msra.mxu0 0.0
    %1385 = vmatprep.subr.mxu0 0.0
    %1386 = vmatpush2.msra.mxu0 0.0
    %1387 = vmatprep.subr.mxu0 0.0
    %1388 = vmatpush2.msra.mxu0 0.0
    %1389 = vmatprep.mubr.f32.mxu0 0.0
    %1390 = vmatmul.mubr.f32.gmra.mxu0 %v1323
    %v1391 = vpop.f32.mrf.mxu0
    %v1392 = vadd.f32 0.0, %v1391
    %v1393 = vpop.f32.mrf.mxu0
    %1394 = vdwg.mxu0
    %1395 = vrot.lane.b32.xlu0 %v130, 40
    %v1396 = vpop.permute.xlu0 %1395
    %v1399 = vsel %vm136, %v1315, 0
    %1401 = vmatprep.subr.mxu0 0.0
    %1402 = vmatpush1.msra.mxu0 0.0
    %1403 = vmatprep.subr.mxu0 0.0
    %1404 = vmatpush1.msra.mxu0 0.0
    %1405 = vmatprep.subr.mxu0 0.0
    %1406 = vmatpush1.msra.mxu0 0.0
    %1407 = vmatprep.subr.mxu0 0.0
    %1408 = vmatpush1.msra.mxu0 0.0
    %1409 = vmatprep.subr.mxu0 0.0
    %1410 = vmatpush1.msra.mxu0 0.0
    %1411 = vmatprep.subr.mxu0 0.0
    %1412 = vmatpush1.msra.mxu0 0.0
    %1413 = vmatprep.subr.mxu0 0.0
    %1414 = vmatpush1.msra.mxu0 0.0
    %1415 = vmatprep.subr.mxu0 0.0
    %1416 = vmatpush1.msra.mxu0 0.0
    %1417 = vmatprep.subr.mxu0 0.0
    %1418 = vmatpush1.msra.mxu0 0.0
    %1419 = vmatprep.subr.mxu0 0.0
    %1420 = vmatpush1.msra.mxu0 0.0
    %1421 = vmatprep.subr.mxu0 0.0
    %1422 = vmatpush1.msra.mxu0 0.0
    %1423 = vmatprep.subr.mxu0 0.0
    %1424 = vmatpush1.msra.mxu0 0.0
    %1425 = vmatprep.subr.mxu0 0.0
    %1426 = vmatpush1.msra.mxu0 0.0
    %1427 = vmatprep.subr.mxu0 0.0
    %1428 = vmatpush1.msra.mxu0 0.0
    %1429 = vmatprep.subr.mxu0 0.0
    %1430 = vmatpush1.msra.mxu0 0.0
    %1431 = vmatprep.subr.mxu0 0.0
    %1432 = vmatpush1.msra.mxu0 %v1396
    %1433 = vmatprep.subr.mxu0 0.0
    %1434 = vmatpush2.msra.mxu0 0.0
    %1435 = vmatprep.subr.mxu0 0.0
    %1436 = vmatpush2.msra.mxu0 0.0
    %1437 = vmatprep.subr.mxu0 0.0
    %1438 = vmatpush2.msra.mxu0 0.0
    %1439 = vmatprep.subr.mxu0 0.0
    %1440 = vmatpush2.msra.mxu0 0.0
    %1441 = vmatprep.subr.mxu0 0.0
    %1442 = vmatpush2.msra.mxu0 0.0
    %1443 = vmatprep.subr.mxu0 0.0
    %1444 = vmatpush2.msra.mxu0 0.0
    %1445 = vmatprep.subr.mxu0 0.0
    %1446 = vmatpush2.msra.mxu0 0.0
    %1447 = vmatprep.subr.mxu0 0.0
    %1448 = vmatpush2.msra.mxu0 0.0
    %1449 = vmatprep.subr.mxu0 0.0
    %1450 = vmatpush2.msra.mxu0 0.0
    %1451 = vmatprep.subr.mxu0 0.0
    %1452 = vmatpush2.msra.mxu0 0.0
    %1453 = vmatprep.subr.mxu0 0.0
    %1454 = vmatpush2.msra.mxu0 0.0
    %1455 = vmatprep.subr.mxu0 0.0
    %1456 = vmatpush2.msra.mxu0 0.0
    %1457 = vmatprep.subr.mxu0 0.0
    %1458 = vmatpush2.msra.mxu0 0.0
    %1459 = vmatprep.subr.mxu0 0.0
    %1460 = vmatpush2.msra.mxu0 0.0
    %1461 = vmatprep.subr.mxu0 0.0
    %1462 = vmatpush2.msra.mxu0 0.0
    %1463 = vmatprep.subr.mxu0 0.0
    %1464 = vmatpush2.msra.mxu0 0.0
    %1465 = vmatprep.mubr.f32.mxu0 0.0
    %1466 = vmatmul.mubr.f32.gmra.mxu0 %v1399
    %v1467 = vpop.f32.mrf.mxu0
    %v1468 = vadd.f32 0.0, %v1467
    %v1469 = vpop.f32.mrf.mxu0
    %1470 = vdwg.mxu0
    %1473 = vrot.lane.b32.xlu0 %v722, 8
    %v1474 = vpop.permute.xlu0 %1473
    %1475 = vrot.lane.b32.xlu0 %v798, 8
    %v1476 = vpop.permute.xlu0 %1475
    %1481 = vrot.lane.b32.xlu0 %v1057, 16
    %v1482 = vpop.permute.xlu0 %1481
    %1483 = vrot.lane.b32.xlu0 %v1133, 16
    %v1484 = vpop.permute.xlu0 %1483
    %1489 = vrot.lane.b32.xlu0 %v1392, 24
    %v1490 = vpop.permute.xlu0 %1489
    %1491 = vrot.lane.b32.xlu0 %v1468, 24
    %v1492 = vpop.permute.xlu0 %1491
    %v1495 = vsel %vm136, %v387, %v1474
    %v1496 = vsel %vm136, %v463, %v1476
    %vm1497 = vcmask 130048
    %v1498 = vsel %vm1497, %v1495, %v1482
    %v1499 = vsel %vm1497, %v1496, %v1484
    %vm1500 = vcmask 195584
    %v1501 = vsel %vm1500, %v1498, %v1490
    %v1502 = vsel %vm1500, %v1499, %v1492
    %v1503 = vlaneseq
    %v1504 = vshrl.u32 %v1503, 7
    %v1505 = vsub.s32 0, %v1504
    %v1506 = vrot.slane %v40, %v1505
    %1511 = vrot.lane.b32.xlu0 %v23, 32
    %v1512 = vpop.permute.xlu0 %1511
    %1513 = vrot.lane.b32.xlu0 %v24, 32
    %v1514 = vpop.permute.xlu0 %1513
    %1515 = vrot.lane.b32.xlu0 %v25, 32
    %v1516 = vpop.permute.xlu0 %1515
    %1517 = vrot.lane.b32.xlu0 %v26, 32
    %v1518 = vpop.permute.xlu0 %1517
    %v1524 = vsel %vm51, %v1501, 0
    %v1527 = vsel %vm51, %v1502, 0
    %1529 = vmatprep.subr.mxu0 0.0
    %1530 = vmatpush1.msra.mxu0 0.0
    %1531 = vmatprep.subr.mxu0 0.0
    %1532 = vmatpush1.msra.mxu0 0.0
    %1533 = vmatprep.subr.mxu0 0.0
    %1534 = vmatpush1.msra.mxu0 0.0
    %1535 = vmatprep.subr.mxu0 0.0
    %1536 = vmatpush1.msra.mxu0 0.0
    %1537 = vmatprep.subr.mxu0 0.0
    %1538 = vmatpush1.msra.mxu0 0.0
    %1539 = vmatprep.subr.mxu0 0.0
    %1540 = vmatpush1.msra.mxu0 0.0
    %1541 = vmatprep.subr.mxu0 0.0
    %1542 = vmatpush1.msra.mxu0 0.0
    %1543 = vmatprep.subr.mxu0 0.0
    %1544 = vmatpush1.msra.mxu0 0.0
    %1545 = vmatprep.subr.mxu0 0.0
    %1546 = vmatpush1.msra.mxu0 0.0
    %1547 = vmatprep.subr.mxu0 0.0
    %1548 = vmatpush1.msra.mxu0 0.0
    %1549 = vmatprep.subr.mxu0 0.0
    %1550 = vmatpush1.msra.mxu0 0.0
    %1551 = vmatprep.subr.mxu0 0.0
    %1552 = vmatpush1.msra.mxu0 0.0
    %1553 = vmatprep.subr.mxu0 0.0
    %1554 = vmatpush1.msra.mxu0 %v1518
    %1555 = vmatprep.subr.mxu0 0.0
    %1556 = vmatpush1.msra.mxu0 %v1516
    %1557 = vmatprep.subr.mxu0 0.0
    %1558 = vmatpush1.msra.mxu0 %v1514
    %1559 = vmatprep.subr.mxu0 0.0
    %1560 = vmatpush1.msra.mxu0 %v1512
    %1561 = vmatprep.subr.mxu0 0.0
    %1562 = vmatpush2.msra.mxu0 0.0
    %1563 = vmatprep.subr.mxu0 0.0
    %1564 = vmatpush2.msra.mxu0 0.0
    %1565 = vmatprep.subr.mxu0 0.0
    %1566 = vmatpush2.msra.mxu0 0.0
    %1567 = vmatprep.subr.mxu0 0.0
    %1568 = vmatpush2.msra.mxu0 0.0
    %1569 = vmatprep.subr.mxu0 0.0
    %1570 = vmatpush2.msra.mxu0 0.0
    %1571 = vmatprep.subr.mxu0 0.0
    %1572 = vmatpush2.msra.mxu0 0.0
    %1573 = vmatprep.subr.mxu0 0.0
    %1574 = vmatpush2.msra.mxu0 0.0
    %1575 = vmatprep.subr.mxu0 0.0
    %1576 = vmatpush2.msra.mxu0 0.0
    %1577 = vmatprep.subr.mxu0 0.0
    %1578 = vmatpush2.msra.mxu0 0.0
    %1579 = vmatprep.subr.mxu0 0.0
    %1580 = vmatpush2.msra.mxu0 0.0
    %1581 = vmatprep.subr.mxu0 0.0
    %1582 = vmatpush2.msra.mxu0 0.0
    %1583 = vmatprep.subr.mxu0 0.0
    %1584 = vmatpush2.msra.mxu0 0.0
    %1585 = vmatprep.subr.mxu0 0.0
    %1586 = vmatpush2.msra.mxu0 0.0
    %1587 = vmatprep.subr.mxu0 0.0
    %1588 = vmatpush2.msra.mxu0 0.0
    %1589 = vmatprep.subr.mxu0 0.0
    %1590 = vmatpush2.msra.mxu0 0.0
    %1591 = vmatprep.subr.mxu0 0.0
    %1592 = vmatpush2.msra.mxu0 0.0
    %1593 = vmatprep.mubr.f32.mxu0 0.0
    %1594 = vmatmul.mubr.f32.gmra.mxu0 %v1524
    %v1595 = vpop.f32.mrf.mxu0
    %v1596 = vadd.f32 %v1506, %v1595
    %v1597 = vpop.f32.mrf.mxu0
    %1598 = vmatprep.mubr.f32.mxu0 0.0
    %1599 = vmatmul.mubr.f32.gmra.mxu0 %v1527
    %v1600 = vpop.f32.mrf.mxu0
    %v1601 = vadd.f32 %v1506, %v1600
    %v1602 = vpop.f32.mrf.mxu0
    %1603 = vdwg.mxu0
    %v1604 = vadd.f32 %v1596, %v21
    %v1605 = vadd.f32 %v1601, %v22
    %v1606 = vsel %vm51, %v1604, 0.0
    %1607 = vadd.xlane.f32.xlu0 %v1606
    %v1608 = vpop.xlane.xlu0 %1607
    %v1609 = vsel %vm51, %v1605, 0.0
    %1610 = vadd.xlane.f32.xlu0 %v1609
    %v1611 = vpop.xlane.xlu0 %1610
    %v1612 = vrcp.pop 32.0
    %v1613 = vmul.f32 %v1608, %v1612
    %v1614 = vmul.f32 %v1611, %v1612
    %v1615 = vsub.f32 %v1604, %v1613
    %v1616 = vsub.f32 %v1605, %v1614
    %v1617 = vmul.f32 %v1615, %v1615
    %v1618 = vmul.f32 %v1616, %v1616
    %v1619 = vsel %vm51, %v1617, 0.0
    %1620 = vadd.xlane.f32.xlu0 %v1619
    %v1621 = vpop.xlane.xlu0 %1620
    %v1622 = vsel %vm51, %v1618, 0.0
    %1623 = vadd.xlane.f32.xlu0 %v1622
    %v1624 = vpop.xlane.xlu0 %1623
    %v1625 = vmul.f32 %v1621, %v1612
    %v1626 = vmul.f32 %v1624, %v1612
    %v1627 = vadd.f32 %v1625, 1e-05
    %v1628 = vadd.f32 %v1626, 1e-05
    %v1629 = vrsqrt.pop %v1627
    %v1630 = vrsqrt.pop %v1628
    %v1631 = vmul.f32 %v1615, %v1629
    %v1632 = vmul.f32 %v1616, %v1630
    %v1633 = vlaneseq
    %v1634 = vshrl.u32 %v1633, 7
    %v1635 = vsub.s32 0, %v1634
    %v1636 = vrot.slane %v43, %v1635
    %v1637 = vmul.f32 %v1631, %v1636
    %v1638 = vmul.f32 %v1632, %v1636
    %v1639 = vlaneseq
    %v1640 = vshrl.u32 %v1639, 7
    %v1641 = vsub.s32 0, %v1640
    %v1642 = vrot.slane %v44, %v1641
    %v1643 = vadd.f32 %v1637, %v1642
    %v1644 = vadd.f32 %v1638, %v1642
    %v1645 = vlaneseq
    %v1646 = vshrl.u32 %v1645, 7
    %v1647 = vsub.s32 0, %v1646
    %v1648 = vrot.slane %v41, %v1647
    %v1650 = vsel %vm51, %v1643, 0
    %v1653 = vsel %vm51, %v1644, 0
    %1655 = vmatprep.subr.mxu0 0.0
    %1656 = vmatpush1.msra.mxu0 0.0
    %1657 = vmatprep.subr.mxu0 0.0
    %1658 = vmatpush1.msra.mxu0 0.0
    %1659 = vmatprep.subr.mxu0 0.0
    %1660 = vmatpush1.msra.mxu0 0.0
    %1661 = vmatprep.subr.mxu0 0.0
    %1662 = vmatpush1.msra.mxu0 0.0
    %1663 = vmatprep.subr.mxu0 0.0
    %1664 = vmatpush1.msra.mxu0 0.0
    %1665 = vmatprep.subr.mxu0 0.0
    %1666 = vmatpush1.msra.mxu0 0.0
    %1667 = vmatprep.subr.mxu0 0.0
    %1668 = vmatpush1.msra.mxu0 0.0
    %1669 = vmatprep.subr.mxu0 0.0
    %1670 = vmatpush1.msra.mxu0 0.0
    %1671 = vmatprep.subr.mxu0 0.0
    %1672 = vmatpush1.msra.mxu0 0.0
    %1673 = vmatprep.subr.mxu0 0.0
    %1674 = vmatpush1.msra.mxu0 0.0
    %1675 = vmatprep.subr.mxu0 0.0
    %1676 = vmatpush1.msra.mxu0 0.0
    %1677 = vmatprep.subr.mxu0 0.0
    %1678 = vmatpush1.msra.mxu0 0.0
    %1679 = vmatprep.subr.mxu0 0.0
    %1680 = vmatpush1.msra.mxu0 %v30
    %1681 = vmatprep.subr.mxu0 0.0
    %1682 = vmatpush1.msra.mxu0 %v29
    %1683 = vmatprep.subr.mxu0 0.0
    %1684 = vmatpush1.msra.mxu0 %v28
    %1685 = vmatprep.subr.mxu0 0.0
    %1686 = vmatpush1.msra.mxu0 %v27
    %1687 = vmatprep.subr.mxu0 0.0
    %1688 = vmatpush2.msra.mxu0 0.0
    %1689 = vmatprep.subr.mxu0 0.0
    %1690 = vmatpush2.msra.mxu0 0.0
    %1691 = vmatprep.subr.mxu0 0.0
    %1692 = vmatpush2.msra.mxu0 0.0
    %1693 = vmatprep.subr.mxu0 0.0
    %1694 = vmatpush2.msra.mxu0 0.0
    %1695 = vmatprep.subr.mxu0 0.0
    %1696 = vmatpush2.msra.mxu0 0.0
    %1697 = vmatprep.subr.mxu0 0.0
    %1698 = vmatpush2.msra.mxu0 0.0
    %1699 = vmatprep.subr.mxu0 0.0
    %1700 = vmatpush2.msra.mxu0 0.0
    %1701 = vmatprep.subr.mxu0 0.0
    %1702 = vmatpush2.msra.mxu0 0.0
    %1703 = vmatprep.subr.mxu0 0.0
    %1704 = vmatpush2.msra.mxu0 0.0
    %1705 = vmatprep.subr.mxu0 0.0
    %1706 = vmatpush2.msra.mxu0 0.0
    %1707 = vmatprep.subr.mxu0 0.0
    %1708 = vmatpush2.msra.mxu0 0.0
    %1709 = vmatprep.subr.mxu0 0.0
    %1710 = vmatpush2.msra.mxu0 0.0
    %1711 = vmatprep.subr.mxu0 0.0
    %1712 = vmatpush2.msra.mxu0 0.0
    %1713 = vmatprep.subr.mxu0 0.0
    %1714 = vmatpush2.msra.mxu0 0.0
    %1715 = vmatprep.subr.mxu0 0.0
    %1716 = vmatpush2.msra.mxu0 0.0
    %1717 = vmatprep.subr.mxu0 0.0
    %1718 = vmatpush2.msra.mxu0 0.0
    %1719 = vmatprep.mubr.f32.mxu0 0.0
    %1720 = vmatmul.mubr.f32.gmra.mxu0 %v1650
    %v1721 = vpop.f32.mrf.mxu0
    %v1722 = vadd.f32 %v1648, %v1721
    %v1723 = vpop.f32.mrf.mxu0
    %1724 = vmatprep.mubr.f32.mxu0 0.0
    %1725 = vmatmul.mubr.f32.gmra.mxu0 %v1653
    %v1726 = vpop.f32.mrf.mxu0
    %v1727 = vadd.f32 %v1648, %v1726
    %v1728 = vpop.f32.mrf.mxu0
    %1729 = vdwg.mxu0
    %v1730 = vmax.f32 %v1722, 0.0
    %v1731 = vmax.f32 %v1727, 0.0
    %v1732 = vlaneseq
    %v1733 = vshrl.u32 %v1732, 7
    %v1734 = vsub.s32 0, %v1733
    %v1735 = vrot.slane %v42, %v1734
    %vm1736 = vcmask 523264
    %v1738 = vsel %vm1736, %v1730, 0
    %v1741 = vsel %vm1736, %v1731, 0
    %1743 = vmatprep.subr.mxu0 0.0
    %1744 = vmatpush1.msra.mxu0 0.0
    %1745 = vmatprep.subr.mxu0 0.0
    %1746 = vmatpush1.msra.mxu0 0.0
    %1747 = vmatprep.subr.mxu0 0.0
    %1748 = vmatpush1.msra.mxu0 0.0
    %1749 = vmatprep.subr.mxu0 0.0
    %1750 = vmatpush1.msra.mxu0 0.0
    %1751 = vmatprep.subr.mxu0 0.0
    %1752 = vmatpush1.msra.mxu0 0.0
    %1753 = vmatprep.subr.mxu0 0.0
    %1754 = vmatpush1.msra.mxu0 0.0
    %1755 = vmatprep.subr.mxu0 0.0
    %1756 = vmatpush1.msra.mxu0 0.0
    %1757 = vmatprep.subr.mxu0 0.0
    %1758 = vmatpush1.msra.mxu0 0.0
    %1759 = vmatprep.subr.mxu0 0.0
    %1760 = vmatpush1.msra.mxu0 %v38
    %1761 = vmatprep.subr.mxu0 0.0
    %1762 = vmatpush1.msra.mxu0 %v37
    %1763 = vmatprep.subr.mxu0 0.0
    %1764 = vmatpush1.msra.mxu0 %v36
    %1765 = vmatprep.subr.mxu0 0.0
    %1766 = vmatpush1.msra.mxu0 %v35
    %1767 = vmatprep.subr.mxu0 0.0
    %1768 = vmatpush1.msra.mxu0 %v34
    %1769 = vmatprep.subr.mxu0 0.0
    %1770 = vmatpush1.msra.mxu0 %v33
    %1771 = vmatprep.subr.mxu0 0.0
    %1772 = vmatpush1.msra.mxu0 %v32
    %1773 = vmatprep.subr.mxu0 0.0
    %1774 = vmatpush1.msra.mxu0 %v31
    %1775 = vmatprep.subr.mxu0 0.0
    %1776 = vmatpush2.msra.mxu0 0.0
    %1777 = vmatprep.subr.mxu0 0.0
    %1778 = vmatpush2.msra.mxu0 0.0
    %1779 = vmatprep.subr.mxu0 0.0
    %1780 = vmatpush2.msra.mxu0 0.0
    %1781 = vmatprep.subr.mxu0 0.0
    %1782 = vmatpush2.msra.mxu0 0.0
    %1783 = vmatprep.subr.mxu0 0.0
    %1784 = vmatpush2.msra.mxu0 0.0
    %1785 = vmatprep.subr.mxu0 0.0
    %1786 = vmatpush2.msra.mxu0 0.0
    %1787 = vmatprep.subr.mxu0 0.0
    %1788 = vmatpush2.msra.mxu0 0.0
    %1789 = vmatprep.subr.mxu0 0.0
    %1790 = vmatpush2.msra.mxu0 0.0
    %1791 = vmatprep.subr.mxu0 0.0
    %1792 = vmatpush2.msra.mxu0 0.0
    %1793 = vmatprep.subr.mxu0 0.0
    %1794 = vmatpush2.msra.mxu0 0.0
    %1795 = vmatprep.subr.mxu0 0.0
    %1796 = vmatpush2.msra.mxu0 0.0
    %1797 = vmatprep.subr.mxu0 0.0
    %1798 = vmatpush2.msra.mxu0 0.0
    %1799 = vmatprep.subr.mxu0 0.0
    %1800 = vmatpush2.msra.mxu0 0.0
    %1801 = vmatprep.subr.mxu0 0.0
    %1802 = vmatpush2.msra.mxu0 0.0
    %1803 = vmatprep.subr.mxu0 0.0
    %1804 = vmatpush2.msra.mxu0 0.0
    %1805 = vmatprep.subr.mxu0 0.0
    %1806 = vmatpush2.msra.mxu0 0.0
    %1807 = vmatprep.mubr.f32.mxu0 0.0
    %1808 = vmatmul.mubr.f32.gmra.mxu0 %v1738
    %v1809 = vpop.f32.mrf.mxu0
    %v1810 = vadd.f32 %v1735, %v1809
    %v1811 = vpop.f32.mrf.mxu0
    %1812 = vmatprep.mubr.f32.mxu0 0.0
    %1813 = vmatmul.mubr.f32.gmra.mxu0 %v1741
    %v1814 = vpop.f32.mrf.mxu0
    %v1815 = vadd.f32 %v1735, %v1814
    %v1816 = vpop.f32.mrf.mxu0
    %1817 = vdwg.mxu0
    %v1818 = vadd.f32 %v1810, %v1643
    %v1819 = vadd.f32 %v1815, %v1644
    %v1820 = vsel %vm51, %v1818, 0.0
    %1821 = vadd.xlane.f32.xlu0 %v1820
    %v1822 = vpop.xlane.xlu0 %1821
    %v1823 = vsel %vm51, %v1819, 0.0
    %1824 = vadd.xlane.f32.xlu0 %v1823
    %v1825 = vpop.xlane.xlu0 %1824
    %v1826 = vmul.f32 %v1822, %v1612
    %v1827 = vmul.f32 %v1825, %v1612
    %v1828 = vsub.f32 %v1818, %v1826
    %v1829 = vsub.f32 %v1819, %v1827
    %v1830 = vmul.f32 %v1828, %v1828
    %v1831 = vmul.f32 %v1829, %v1829
    %v1832 = vsel %vm51, %v1830, 0.0
    %1833 = vadd.xlane.f32.xlu0 %v1832
    %v1834 = vpop.xlane.xlu0 %1833
    %v1835 = vsel %vm51, %v1831, 0.0
    %1836 = vadd.xlane.f32.xlu0 %v1835
    %v1837 = vpop.xlane.xlu0 %1836
    %v1838 = vmul.f32 %v1834, %v1612
    %v1839 = vmul.f32 %v1837, %v1612
    %v1840 = vadd.f32 %v1838, 1e-05
    %v1841 = vadd.f32 %v1839, 1e-05
    %v1842 = vrsqrt.pop %v1840
    %v1843 = vrsqrt.pop %v1841
    %v1844 = vmul.f32 %v1828, %v1842
    %v1845 = vmul.f32 %v1829, %v1843
    %v1846 = vlaneseq
    %v1847 = vshrl.u32 %v1846, 7
    %v1848 = vsub.s32 0, %v1847
    %v1849 = vrot.slane %v45, %v1848
    %v1850 = vmul.f32 %v1844, %v1849
    %v1851 = vmul.f32 %v1845, %v1849
    %v1852 = vlaneseq
    %v1853 = vshrl.u32 %v1852, 7
    %v1854 = vsub.s32 0, %v1853
    %v1855 = vrot.slane %v46, %v1854
    %v1856 = vadd.f32 %v1850, %v1855
    %v1857 = vadd.f32 %v1851, %v1855
    %1858 = vst.msk [vmem:[#allocation2] sm:$0xff] %vm51, %v1856
    %1859 = vst.msk [vmem:[#allocation2 + $0x8] sm:$0xff] %vm51, %v1857
    // Predicated region
    $region18: #{tpu_custom_call.1} parent=1 // pred_check
      _
    $region19: #{tpu_custom_call.1} parent=1 // pred_check_branch
      %1861 = sbr.rel (0) target = $region21
    $region20: #{tpu_custom_call.1} parent=1 // pred_region
      %s1863 = ssub.s32 256, 256
      %1864 = vsyncadd [#allocation3], %s1863
      %s1865 = sshll.u32 [#allocation2], 4
      %s1866 = int_to_ptr.vmem [resolvable:$true] %s1865
      %1871 = dma.vmem_to_hbm [thread:$0]  %s1866, 256, %s4, [#allocation3], 128, 128, 8
    $region21: #{tpu_custom_call.1} parent=1 // pred_fallthru
      _
    // Predicated region
    $region22: #{tpu_custom_call.1} parent=1 // pred_check
      _
    $region23: #{tpu_custom_call.1} parent=1 // pred_check_branch
      %1873 = sbr.rel (0) target = $region25
    $region24: #{tpu_custom_call.1} parent=1 // pred_region
      %s1875 = ssub.s32 1024, 1024
      %1876 = vsyncadd [#allocation5], %s1875
      %s1877 = sshll.u32 [#allocation4], 4
      %s1878 = int_to_ptr.vmem [resolvable:$true] %s1877
      %1883 = dma.vmem_to_hbm [thread:$0]  %s1878, 1024, %s5, [#allocation5], 128, 128, 8
    $region25: #{tpu_custom_call.1} parent=1 // pred_fallthru
      _
    // Predicated region
    $region26: #{tpu_custom_call.1} parent=1 // pred_check
      _
    $region27: #{tpu_custom_call.1} parent=1 // pred_check_branch
      %1885 = sbr.rel (0) target = $region29
    $region28: #{tpu_custom_call.1} parent=1 // pred_region
      %1886 = dma.done [#allocation3], 256
    $region29: #{tpu_custom_call.1} parent=1 // pred_fallthru
      _
    // Predicated region
    $region30: #{tpu_custom_call.1} parent=1 // pred_check
      _
    $region31: #{tpu_custom_call.1} parent=1 // pred_check_branch
      %1888 = sbr.rel (0) target = $region33
    $region32: #{tpu_custom_call.1} parent=1 // pred_region
      %1889 = dma.done [#allocation5], 1024
    $region33: #{tpu_custom_call.1} parent=1 // pred_fallthru
      _
    %1890 = vsyncpa [#allocation3], 1
    %1891 = vsyncpa [#allocation5], 1

</llo_original>
